<compile_context>
chip_gen: v7x
topology: tpu7x:2x2x1
jax: 0.10.0
libtpu: 0.0.40
codegen_flags: <defaults>
</compile_context>

<pallas_src>
import functools

import jax
import jax.numpy as jnp
from jax.experimental import pallas as pl
from jax.experimental.pallas import tpu as pltpu


def double_dgc_kernel(x_ref, st_ref, awt1_ref, awt2_ref, w1a_ref, w1b_ref,
                      pen1_ref, pen2_ref, wct_ref, bc_ref,
                      out_ref, m1_ref, m2_ref, dl_ref, *, matmul_dtype):
    # Block shapes:
    #   x_ref   : (TB, N, F)   f32        st_ref : (TB, 2, N) f32 (state^T)
    #   awt1/2  : (TN, N)      f32        w1a/b  : (F, N)     f32
    #   pen1/2  : (TN, N)      f32 (= -1e16*(1-adj) + bias, row tile)
    #   wct     : (F, 2)       f32        bc     : (1, 2)     f32
    #   out_ref : (TB, TN, 2)  m1/m2: (TB, TN, N)  dl_ref: (TB, TN, 1)
    tb = x_ref.shape[0]
    tn = m1_ref.shape[1]
    row0 = pl.multiple_of(pl.program_id(0) * tn, tn)

    # Batch-invariant operands: load + cast once per grid step (hoisted).
    awt1 = awt1_ref[...].astype(matmul_dtype)      # (TN, N)  rows of (A*w2[0])^T
    awt2 = awt2_ref[...].astype(matmul_dtype)      # (TN, N)  rows of (B*w2[1])^T
    w1a = w1a_ref[...].astype(matmul_dtype)        # (F, N)
    w1b = w1b_ref[...].astype(matmul_dtype)        # (F, N)
    pen1 = pen1_ref[...]                           # (TN, N) f32, bias folded in
    pen2 = pen2_ref[...]                           # (TN, N) f32
    wct = wct_ref[...]                             # (F, 2)  f32
    bc = bc_ref[...]                               # (1, 2)  f32

    def softmax_rows(logits):                      # f32 in / f32 out, row-wise
        m = jnp.max(logits, axis=-1, keepdims=True)
        e = jnp.exp(logits - m)
        s = jnp.sum(e, axis=-1, keepdims=True)
        r = pl.reciprocal(s, approx=True)          # EUP slot
        r = r * (2.0 - s * r)                      # one Newton step -> ~f32 exact
        return e * r

    # Static unroll over the batch elements folded into this grid step.
    for b in range(tb):
        x_b = x_ref[b].astype(matmul_dtype)                 # (N, F)  MXU operand
        x_rows = x_ref[b, pl.ds(row0, tn), :]               # (TN, F) f32 row tile
        st_t = st_ref[b]                                    # (2, N)  f32

        # demand = tanh(Linear_{F->2}(x)) * 0.5   (tiny f32 matmul)
        demand = jnp.tanh(
            jnp.dot(x_rows, wct, preferred_element_type=jnp.float32) + bc) * 0.5

        # masked graph attention 1: softmax(((A*w2[0])^T x) w1[0] + bias + pen)
        h1 = jnp.dot(awt1, x_b, preferred_element_type=jnp.float32)      # (TN, F)
        l1 = jnp.dot(h1.astype(matmul_dtype), w1a,
                     preferred_element_type=jnp.float32) + pen1          # (TN, N)
        mask1 = softmax_rows(l1)

        # masked graph attention 2
        h2 = jnp.dot(awt2, x_b, preferred_element_type=jnp.float32)
        l2 = jnp.dot(h2.astype(matmul_dtype), w1b,
                     preferred_element_type=jnp.float32) + pen2
        mask2 = softmax_rows(l2)

        # v/q: broadcast-multiply + lane reduction (replaces (N,N)@(N,1) matmuls)
        v = jnp.sum(mask1 * st_t[0:1, :], axis=-1, keepdims=True)        # (TN, 1)
        q = jnp.sum(mask2 * st_t[1:2, :], axis=-1, keepdims=True)        # (TN, 1)

        m1_ref[b] = mask1.astype(m1_ref.dtype)
        m2_ref[b] = mask2.astype(m2_ref.dtype)
        out_ref[b, :, 0:1] = v + demand[:, 0:1]
        out_ref[b, :, 1:2] = q + demand[:, 1:2]
        dl_ref[b] = demand[:, 1:2]                 # demand[..., -1]


def double_dgc_forward(x, state, A, B_adj, w1, w2, bias, wc, bc, *,
                       batch_block=None, row_block=None,
                       matmul_dtype=jnp.float32, mask_dtype=jnp.float32):
    """DoubleDGC forward.  Returns (output, mask1, mask2, demand[..., -1]).

    x: (B, N, F)   state: (B, N, 2)   A, B_adj: (N, N)
    w1: (2, F, N)  w2: (2, N, N)      bias: (2, N, 1)
    wc: (2, F) convert (Linear) weight,  bc: (2,) convert bias.
    matmul_dtype=jnp.bfloat16 uses the MXU bf16 rate on TPU (f32 accumulation);
    default f32 reproduces the module numerics exactly and runs on any backend.
    """
    f32 = jnp.float32
    x = x.astype(f32)
    state = state.astype(f32)
    A = A.astype(f32)
    B_adj = B_adj.astype(f32)
    w1 = w1.astype(f32)
    w2 = w2.astype(f32)
    bias = bias.astype(f32)
    wc = wc.astype(f32)
    bc = bc.astype(f32)
    Bsz, N, Fd = x.shape

    tb = Bsz if batch_block is None else batch_block
    if row_block is None:
        # Row-tile the masks for large graphs so resident (N,N) operands stay
        # inside v7x's 64 MiB VMEM and the HBM writeback pipelines deeply.
        tn = 256 if (N > 1024 and N % 256 == 0) else N
    else:
        tn = row_block
    assert Bsz % tb == 0 and N % tn == 0
    if tn != N:
        assert tn % 128 == 0, "row_block must be a multiple of 128"

    # Cheap parameter glue (plain JAX): fold bias into the additive penalty and
    # pre-transpose so the kernel only touches lane-dense layouts.
    awt1 = (A * w2[0]).T                          # (N, N)
    awt2 = (B_adj * w2[1]).T                      # (N, N)
    pen1 = -1e16 * (1.0 - A) + bias[0]            # (N, N), bias folded in
    pen2 = -1e16 * (1.0 - B_adj) + bias[1]        # (N, N)
    state_t = jnp.swapaxes(state, -1, -2)         # (B, 2, N) lane-dense state
    wct = wc.T                                    # (F, 2)
    bc2 = bc.reshape(1, 2)

    # Rows outer, batch inner: the (N,N)-derived blocks keep a constant block
    # index across the fastest-varying axis, so Pallas skips their re-DMA.
    grid = (N // tn, Bsz // tb)

    # Rough per-step VMEM footprint -> scoped limit (headroom for double-buffer).
    blk_bytes = 4 * (tb * N * Fd + tb * 2 * N + 4 * tn * N + 2 * Fd * N
                     + 2 * Fd + 2 + tb * tn * 2 + 2 * tb * tn * N + tb * tn)
    vmem_limit = int(min(64 * 2**20, max(32 * 2**20, 4 * blk_bytes)))

    kernel = functools.partial(double_dgc_kernel, matmul_dtype=matmul_dtype)

    out, m1, m2, dl = pl.pallas_call(
        kernel,
        out_shape=(
            jax.ShapeDtypeStruct((Bsz, N, 2), f32),         # output
            jax.ShapeDtypeStruct((Bsz, N, N), mask_dtype),  # mask1
            jax.ShapeDtypeStruct((Bsz, N, N), mask_dtype),  # mask2
            jax.ShapeDtypeStruct((Bsz, N, 1), f32),         # demand[..., -1]
        ),
        grid_spec=pltpu.PrefetchScalarGridSpec(
            num_scalar_prefetch=0,
            grid=grid,
            in_specs=[
                pl.BlockSpec((tb, N, Fd), lambda rr, bb: (bb, 0, 0)),  # x
                pl.BlockSpec((tb, 2, N), lambda rr, bb: (bb, 0, 0)),   # state^T
                pl.BlockSpec((tn, N), lambda rr, bb: (rr, 0)),         # (A*w2[0])^T
                pl.BlockSpec((tn, N), lambda rr, bb: (rr, 0)),         # (B*w2[1])^T
                pl.BlockSpec((Fd, N), lambda rr, bb: (0, 0)),          # w1[0]
                pl.BlockSpec((Fd, N), lambda rr, bb: (0, 0)),          # w1[1]
                pl.BlockSpec((tn, N), lambda rr, bb: (rr, 0)),         # pen1 (+bias1)
                pl.BlockSpec((tn, N), lambda rr, bb: (rr, 0)),         # pen2 (+bias2)
                pl.BlockSpec((Fd, 2), lambda rr, bb: (0, 0)),          # convert W^T
                pl.BlockSpec((1, 2), lambda rr, bb: (0, 0)),           # convert b
            ],
            out_specs=[
                pl.BlockSpec((tb, tn, 2), lambda rr, bb: (bb, rr, 0)),
                pl.BlockSpec((tb, tn, N), lambda rr, bb: (bb, rr, 0)),
                pl.BlockSpec((tb, tn, N), lambda rr, bb: (bb, rr, 0)),
                pl.BlockSpec((tb, tn, 1), lambda rr, bb: (bb, rr, 0)),
            ],
        ),
        compiler_params=pltpu.CompilerParams(
            dimension_semantics=("parallel", "parallel"),
            vmem_limit_bytes=vmem_limit),
    )(x, state_t, awt1, awt2, w1[0], w1[1], pen1, pen2, wct, bc2)

    return out, m1, m2, dl[:, :, 0]


def reference_forward(x, state, A, B_adj, w1, w2, bias, wc, bc, matmul_dtype=None):
    """Pure-JAX transcription of the PyTorch forward.

    matmul_dtype=None -> exact f32 module math.  matmul_dtype=jnp.bfloat16 casts
    the MXU operands the same way the kernel does (f32 accumulation, f32
    softmax) for a numerically matched comparison.
    """
    f32 = jnp.float32
    cast = (lambda a: a) if matmul_dtype is None else (lambda a: a.astype(matmul_dtype))

    demand = jnp.tanh(jnp.einsum('bnf,cf->bnc', x, wc) + bc) * 0.5

    def attn(adj, w2k, w1k, bk):
        awt = (adj * w2k).T
        h = jnp.einsum('nm,bmf->bnf', cast(awt), cast(x),
                       preferred_element_type=f32)
        logits = jnp.einsum('bnf,fk->bnk', cast(h), cast(w1k),
                            preferred_element_type=f32)
        logits = logits + bk + (-1e16) * (1.0 - adj)
        return jax.nn.softmax(logits, axis=-1)

    mask1 = attn(A, w2[0], w1[0], bias[0])
    mask2 = attn(B_adj, w2[1], w1[1], bias[1])
    v = mask1 @ state[..., :1]
    q = mask2 @ state[..., 1:]
    output = jnp.concatenate((v, q), -1) + demand
    return output, mask1, mask2, demand[..., -1]


if __name__ == "__main__":
    key = jax.random.PRNGKey(0)
    Bsz, N, Fd = 2, 8, 16

    ks = jax.random.split(key, 8)
    std_w1 = (2.0 / (Fd + N)) ** 0.5
    std_w2 = (2.0 / (N + N)) ** 0.5
    w1 = std_w1 * jax.random.normal(ks[0], (2, Fd, N), jnp.float32)
    w2 = std_w2 * jax.random.normal(ks[1], (2, N, N), jnp.float32)
    bias = jnp.zeros((2, N, 1), jnp.float32)
    wc = 0.1 * jax.random.normal(ks[2], (2, Fd), jnp.float32)   # Linear weight (2, F)
    bc = 0.1 * jax.random.normal(ks[3], (2,), jnp.float32)      # Linear bias
    A = (jax.random.uniform(ks[4], (N, N)) > 0.5).astype(jnp.float32)
    B_adj = (jax.random.uniform(ks[5], (N, N)) > 0.5).astype(jnp.float32)
    A = jnp.clip(A + jnp.eye(N, dtype=jnp.float32), 0.0, 1.0)
    B_adj = jnp.clip(B_adj + jnp.eye(N, dtype=jnp.float32), 0.0, 1.0)

    x = jax.random.normal(ks[6], (Bsz, N, Fd), jnp.float32)
    state = jax.random.normal(ks[7], (Bsz, N, 2), jnp.float32)

    # Exact f32 path (runs on any backend, matches the module numerics).
    fwd_f32 = jax.jit(functools.partial(double_dgc_forward,
                                        matmul_dtype=jnp.float32))
    out32, m1_32, m2_32, dl32 = jax.block_until_ready(
        fwd_f32(x, state, A, B_adj, w1, w2, bias, wc, bc))
    ro, rm1, rm2, rd = reference_forward(x, state, A, B_adj, w1, w2, bias, wc, bc)
    assert jnp.allclose(out32, ro, atol=2e-5, rtol=2e-5)
    assert jnp.allclose(m1_32, rm1, atol=2e-5, rtol=2e-5)
    assert jnp.allclose(m2_32, rm2, atol=2e-5, rtol=2e-5)
    assert jnp.allclose(dl32, rd, atol=2e-5, rtol=2e-5)

    # bf16-MXU perf path only where the backend has a bf16xbf16->f32 dot (TPU).
    if jax.default_backend() == "tpu":
        fwd_bf16 = jax.jit(functools.partial(double_dgc_forward,
                                             matmul_dtype=jnp.bfloat16))
        outb, m1b, m2b, dlb = jax.block_until_ready(
            fwd_bf16(x, state, A, B_adj, w1, w2, bias, wc, bc))
        rob, rm1b, rm2b, rdb = reference_forward(x, state, A, B_adj, w1, w2,
                                                 bias, wc, bc,
                                                 matmul_dtype=jnp.bfloat16)
        assert jnp.allclose(outb, rob, atol=1e-4, rtol=1e-4)
        assert jnp.allclose(m1b, rm1b, atol=1e-4, rtol=1e-4)
        assert jnp.allclose(m2b, rm2b, atol=1e-4, rtol=1e-4)
        assert jnp.allclose(dlb, rdb, atol=1e-4, rtol=1e-4)

    print("KERNEL_OK")
</pallas_src>

<mosaic_0001>
module attributes {stable_mosaic.version = 11 : i64} {
  func.func @double_dgc_kernel(%arg0: i32, %arg1: i32, %arg2: memref<2x8x16xf32, #tpu.memory_space<vmem>>, %arg3: memref<2x2x8xf32, #tpu.memory_space<vmem>>, %arg4: memref<8x8xf32, #tpu.memory_space<vmem>>, %arg5: memref<8x8xf32, #tpu.memory_space<vmem>>, %arg6: memref<16x8xf32, #tpu.memory_space<vmem>>, %arg7: memref<16x8xf32, #tpu.memory_space<vmem>>, %arg8: memref<8x8xf32, #tpu.memory_space<vmem>>, %arg9: memref<8x8xf32, #tpu.memory_space<vmem>>, %arg10: memref<16x2xf32, #tpu.memory_space<vmem>>, %arg11: memref<1x2xf32, #tpu.memory_space<vmem>>, %arg12: memref<2x8x2xf32, #tpu.memory_space<vmem>>, %arg13: memref<2x8x8xf32, #tpu.memory_space<vmem>>, %arg14: memref<2x8x8xf32, #tpu.memory_space<vmem>>, %arg15: memref<2x8x1xf32, #tpu.memory_space<vmem>>) attributes {dimension_semantics = [#tpu.dimension_semantics<parallel>, #tpu.dimension_semantics<parallel>], iteration_bounds = array<i64: 1, 1>, scalar_prefetch = 0 : i64, scratch_operands = 0 : i64, tpu.core_type = #tpu.core_type<tc>, window_params = [{transform_indices = @transform_0, window_bounds = array<i64: 2, 8, 16>}, {transform_indices = @transform_1, window_bounds = array<i64: 2, 2, 8>}, {transform_indices = @transform_2, window_bounds = array<i64: 8, 8>}, {transform_indices = @transform_3, window_bounds = array<i64: 8, 8>}, {pipeline_mode = #tpu.pipeline_mode<synchronous>, transform_indices = @transform_4, window_bounds = array<i64: 16, 8>}, {pipeline_mode = #tpu.pipeline_mode<synchronous>, transform_indices = @transform_5, window_bounds = array<i64: 16, 8>}, {transform_indices = @transform_6, window_bounds = array<i64: 8, 8>}, {transform_indices = @transform_7, window_bounds = array<i64: 8, 8>}, {pipeline_mode = #tpu.pipeline_mode<synchronous>, transform_indices = @transform_8, window_bounds = array<i64: 16, 2>}, {pipeline_mode = #tpu.pipeline_mode<synchronous>, transform_indices = @transform_9, window_bounds = array<i64: 1, 2>}, {transform_indices = @transform_10, window_bounds = array<i64: 2, 8, 2>}, {transform_indices = @transform_11, window_bounds = array<i64: 2, 8, 8>}, {transform_indices = @transform_12, window_bounds = array<i64: 2, 8, 8>}, {transform_indices = @transform_13, window_bounds = array<i64: 2, 8, 1>}]} {
    %c8_i32 = arith.constant 8 : i32
    %0 = arith.muli %arg0, %c8_i32 : i32
    %1 = tpu.assume_multiple %0, 8 : i32
    %c0 = arith.constant 0 : index
    %c0_0 = arith.constant 0 : index
    %2 = vector.load %arg4[%c0, %c0_0] : memref<8x8xf32, #tpu.memory_space<vmem>>, vector<8x8xf32>
    %c0_1 = arith.constant 0 : index
    %c0_2 = arith.constant 0 : index
    %3 = vector.load %arg5[%c0_1, %c0_2] : memref<8x8xf32, #tpu.memory_space<vmem>>, vector<8x8xf32>
    %c0_3 = arith.constant 0 : index
    %c0_4 = arith.constant 0 : index
    %4 = vector.load %arg6[%c0_3, %c0_4] : memref<16x8xf32, #tpu.memory_space<vmem>>, vector<16x8xf32>
    %c0_5 = arith.constant 0 : index
    %c0_6 = arith.constant 0 : index
    %5 = vector.load %arg7[%c0_5, %c0_6] : memref<16x8xf32, #tpu.memory_space<vmem>>, vector<16x8xf32>
    %c0_7 = arith.constant 0 : index
    %c0_8 = arith.constant 0 : index
    %6 = vector.load %arg8[%c0_7, %c0_8] : memref<8x8xf32, #tpu.memory_space<vmem>>, vector<8x8xf32>
    %c0_9 = arith.constant 0 : index
    %c0_10 = arith.constant 0 : index
    %7 = vector.load %arg9[%c0_9, %c0_10] : memref<8x8xf32, #tpu.memory_space<vmem>>, vector<8x8xf32>
    %c0_11 = arith.constant 0 : index
    %c0_12 = arith.constant 0 : index
    %8 = vector.load %arg10[%c0_11, %c0_12] : memref<16x2xf32, #tpu.memory_space<vmem>>, vector<16x2xf32>
    %c0_13 = arith.constant 0 : index
    %c0_14 = arith.constant 0 : index
    %9 = vector.load %arg11[%c0_13, %c0_14] : memref<1x2xf32, #tpu.memory_space<vmem>>, vector<1x2xf32>
    %c0_15 = arith.constant 0 : index
    %c0_16 = arith.constant 0 : index
    %c0_17 = arith.constant 0 : index
    %10 = vector.load %arg2[%c0_15, %c0_16, %c0_17] : memref<2x8x16xf32, #tpu.memory_space<vmem>>, vector<1x8x16xf32>
    %11 = vector.shape_cast %10 : vector<1x8x16xf32> to vector<8x16xf32>
    %c0_18 = arith.constant 0 : index
    %12 = arith.index_cast %1 : i32 to index
    %c0_19 = arith.constant 0 : index
    %13 = vector.load %arg2[%c0_18, %12, %c0_19] : memref<2x8x16xf32, #tpu.memory_space<vmem>>, vector<1x8x16xf32>
    %14 = vector.shape_cast %13 : vector<1x8x16xf32> to vector<8x16xf32>
    %c0_20 = arith.constant 0 : index
    %c0_21 = arith.constant 0 : index
    %c0_22 = arith.constant 0 : index
    %15 = vector.load %arg3[%c0_20, %c0_21, %c0_22] : memref<2x2x8xf32, #tpu.memory_space<vmem>>, vector<1x2x8xf32>
    %16 = vector.shape_cast %15 : vector<1x2x8xf32> to vector<2x8xf32>
    %cst = arith.constant dense<0.000000e+00> : vector<8x2xf32>
    %17 = tpu.matmul %14, %8, %cst {dimension_numbers = #tpu.dot_dimension_numbers<[1], [0], [0], [1], [0, 0, 1, 1], [], []>} : vector<8x16xf32>, vector<16x2xf32>, vector<8x2xf32> -> vector<8x2xf32>
    %18 = vector.broadcast %9 : vector<1x2xf32> to vector<8x2xf32>
    %19 = arith.addf %17, %18 : vector<8x2xf32>
    %20 = math.tanh %19 : vector<8x2xf32>
    %cst_23 = arith.constant 5.000000e-01 : f32
    %21 = vector.broadcast %cst_23 : f32 to vector<8x2xf32>
    %22 = arith.mulf %20, %21 : vector<8x2xf32>
    %cst_24 = arith.constant dense<0.000000e+00> : vector<8x16xf32>
    %23 = tpu.matmul %2, %11, %cst_24 {dimension_numbers = #tpu.dot_dimension_numbers<[1], [0], [0], [1], [0, 0, 1, 1], [], []>} : vector<8x8xf32>, vector<8x16xf32>, vector<8x16xf32> -> vector<8x16xf32>
    %cst_25 = arith.constant dense<0.000000e+00> : vector<8x8xf32>
    %24 = tpu.matmul %23, %4, %cst_25 {dimension_numbers = #tpu.dot_dimension_numbers<[1], [0], [0], [1], [0, 0, 1, 1], [], []>} : vector<8x16xf32>, vector<16x8xf32>, vector<8x8xf32> -> vector<8x8xf32>
    %25 = arith.addf %24, %6 : vector<8x8xf32>
    %cst_26 = arith.constant dense<0xFF800000> : vector<8xf32>
    %26 = vector.multi_reduction <maximumf>, %25, %cst_26 [1] : vector<8x8xf32> to vector<8xf32>
    %27 = vector.shape_cast %26 : vector<8xf32> to vector<8x1xf32>
    %28 = vector.broadcast %27 : vector<8x1xf32> to vector<8x8xf32>
    %29 = arith.subf %25, %28 : vector<8x8xf32>
    %30 = math.exp %29 : vector<8x8xf32>
    %cst_27 = arith.constant dense<0.000000e+00> : vector<8xf32>
    %31 = vector.multi_reduction <add>, %30, %cst_27 [1] : vector<8x8xf32> to vector<8xf32>
    %32 = vector.shape_cast %31 : vector<8xf32> to vector<8x1xf32>
    %33 = tpu.reciprocal %32 {approx = true} : vector<8x1xf32> -> vector<8x1xf32>
    %34 = arith.mulf %32, %33 : vector<8x1xf32>
    %cst_28 = arith.constant 2.000000e+00 : f32
    %35 = vector.broadcast %cst_28 : f32 to vector<8x1xf32>
    %36 = arith.subf %35, %34 : vector<8x1xf32>
    %37 = arith.mulf %33, %36 : vector<8x1xf32>
    %38 = vector.broadcast %37 : vector<8x1xf32> to vector<8x8xf32>
    %39 = arith.mulf %30, %38 : vector<8x8xf32>
    %cst_29 = arith.constant dense<0.000000e+00> : vector<8x16xf32>
    %40 = tpu.matmul %3, %11, %cst_29 {dimension_numbers = #tpu.dot_dimension_numbers<[1], [0], [0], [1], [0, 0, 1, 1], [], []>} : vector<8x8xf32>, vector<8x16xf32>, vector<8x16xf32> -> vector<8x16xf32>
    %cst_30 = arith.constant dense<0.000000e+00> : vector<8x8xf32>
    %41 = tpu.matmul %40, %5, %cst_30 {dimension_numbers = #tpu.dot_dimension_numbers<[1], [0], [0], [1], [0, 0, 1, 1], [], []>} : vector<8x16xf32>, vector<16x8xf32>, vector<8x8xf32> -> vector<8x8xf32>
    %42 = arith.addf %41, %7 : vector<8x8xf32>
    %cst_31 = arith.constant dense<0xFF800000> : vector<8xf32>
    %43 = vector.multi_reduction <maximumf>, %42, %cst_31 [1] : vector<8x8xf32> to vector<8xf32>
    %44 = vector.shape_cast %43 : vector<8xf32> to vector<8x1xf32>
    %45 = vector.broadcast %44 : vector<8x1xf32> to vector<8x8xf32>
    %46 = arith.subf %42, %45 : vector<8x8xf32>
    %47 = math.exp %46 : vector<8x8xf32>
    %cst_32 = arith.constant dense<0.000000e+00> : vector<8xf32>
    %48 = vector.multi_reduction <add>, %47, %cst_32 [1] : vector<8x8xf32> to vector<8xf32>
    %49 = vector.shape_cast %48 : vector<8xf32> to vector<8x1xf32>
    %50 = tpu.reciprocal %49 {approx = true} : vector<8x1xf32> -> vector<8x1xf32>
    %51 = arith.mulf %49, %50 : vector<8x1xf32>
    %cst_33 = arith.constant 2.000000e+00 : f32
    %52 = vector.broadcast %cst_33 : f32 to vector<8x1xf32>
    %53 = arith.subf %52, %51 : vector<8x1xf32>
    %54 = arith.mulf %50, %53 : vector<8x1xf32>
    %55 = vector.broadcast %54 : vector<8x1xf32> to vector<8x8xf32>
    %56 = arith.mulf %47, %55 : vector<8x8xf32>
    %57 = vector.extract_strided_slice %16 {offsets = [0, 0], sizes = [1, 8], strides = [1, 1]} : vector<2x8xf32> to vector<1x8xf32>
    %58 = vector.broadcast %57 : vector<1x8xf32> to vector<8x8xf32>
    %59 = arith.mulf %39, %58 : vector<8x8xf32>
    %cst_34 = arith.constant dense<0.000000e+00> : vector<8xf32>
    %60 = vector.multi_reduction <add>, %59, %cst_34 [1] : vector<8x8xf32> to vector<8xf32>
    %61 = vector.shape_cast %60 : vector<8xf32> to vector<8x1xf32>
    %62 = vector.extract_strided_slice %16 {offsets = [1, 0], sizes = [1, 8], strides = [1, 1]} : vector<2x8xf32> to vector<1x8xf32>
    %63 = vector.broadcast %62 : vector<1x8xf32> to vector<8x8xf32>
    %64 = arith.mulf %56, %63 : vector<8x8xf32>
    %cst_35 = arith.constant dense<0.000000e+00> : vector<8xf32>
    %65 = vector.multi_reduction <add>, %64, %cst_35 [1] : vector<8x8xf32> to vector<8xf32>
    %66 = vector.shape_cast %65 : vector<8xf32> to vector<8x1xf32>
    %c0_36 = arith.constant 0 : index
    %c0_37 = arith.constant 0 : index
    %c0_38 = arith.constant 0 : index
    %67 = vector.load %arg13[%c0_36, %c0_37, %c0_38] : memref<2x8x8xf32, #tpu.memory_space<vmem>>, vector<1x8x8xf32>
    %68 = vector.shape_cast %67 : vector<1x8x8xf32> to vector<8x8xf32>
    %69 = vector.shape_cast %39 : vector<8x8xf32> to vector<1x8x8xf32>
    tpu.vector_store %arg13[%c0_36, %c0_37, %c0_38], %69 {strides = array<i32>} : memref<2x8x8xf32, #tpu.memory_space<vmem>>, vector<1x8x8xf32>,
    %c0_39 = arith.constant 0 : index
    %c0_40 = arith.constant 0 : index
    %c0_41 = arith.constant 0 : index
    %70 = vector.load %arg14[%c0_39, %c0_40, %c0_41] : memref<2x8x8xf32, #tpu.memory_space<vmem>>, vector<1x8x8xf32>
    %71 = vector.shape_cast %70 : vector<1x8x8xf32> to vector<8x8xf32>
    %72 = vector.shape_cast %56 : vector<8x8xf32> to vector<1x8x8xf32>
    tpu.vector_store %arg14[%c0_39, %c0_40, %c0_41], %72 {strides = array<i32>} : memref<2x8x8xf32, #tpu.memory_space<vmem>>, vector<1x8x8xf32>,
    %73 = vector.extract_strided_slice %22 {offsets = [0, 0], sizes = [8, 1], strides = [1, 1]} : vector<8x2xf32> to vector<8x1xf32>
    %74 = arith.addf %61, %73 : vector<8x1xf32>
    %c0_42 = arith.constant 0 : index
    %c0_43 = arith.constant 0 : index
    %c0_44 = arith.constant 0 : index
    %75 = vector.load %arg12[%c0_42, %c0_43, %c0_44] : memref<2x8x2xf32, #tpu.memory_space<vmem>>, vector<1x8x1xf32>
    %76 = vector.shape_cast %75 : vector<1x8x1xf32> to vector<8x1xf32>
    %77 = vector.shape_cast %74 : vector<8x1xf32> to vector<1x8x1xf32>
    tpu.vector_store %arg12[%c0_42, %c0_43, %c0_44], %77 {strides = array<i32>} : memref<2x8x2xf32, #tpu.memory_space<vmem>>, vector<1x8x1xf32>,
    %78 = vector.extract_strided_slice %22 {offsets = [0, 1], sizes = [8, 1], strides = [1, 1]} : vector<8x2xf32> to vector<8x1xf32>
    %79 = arith.addf %66, %78 : vector<8x1xf32>
    %c0_45 = arith.constant 0 : index
    %c0_46 = arith.constant 0 : index
    %c1 = arith.constant 1 : index
    %80 = vector.load %arg12[%c0_45, %c0_46, %c1] : memref<2x8x2xf32, #tpu.memory_space<vmem>>, vector<1x8x1xf32>
    %81 = vector.shape_cast %80 : vector<1x8x1xf32> to vector<8x1xf32>
    %82 = vector.shape_cast %79 : vector<8x1xf32> to vector<1x8x1xf32>
    tpu.vector_store %arg12[%c0_45, %c0_46, %c1], %82 {strides = array<i32>} : memref<2x8x2xf32, #tpu.memory_space<vmem>>, vector<1x8x1xf32>,
    %83 = vector.extract_strided_slice %22 {offsets = [0, 1], sizes = [8, 1], strides = [1, 1]} : vector<8x2xf32> to vector<8x1xf32>
    %c0_47 = arith.constant 0 : index
    %c0_48 = arith.constant 0 : index
    %c0_49 = arith.constant 0 : index
    %84 = vector.load %arg15[%c0_47, %c0_48, %c0_49] : memref<2x8x1xf32, #tpu.memory_space<vmem>>, vector<1x8x1xf32>
    %85 = vector.shape_cast %84 : vector<1x8x1xf32> to vector<8x1xf32>
    %86 = vector.shape_cast %83 : vector<8x1xf32> to vector<1x8x1xf32>
    tpu.vector_store %arg15[%c0_47, %c0_48, %c0_49], %86 {strides = array<i32>} : memref<2x8x1xf32, #tpu.memory_space<vmem>>, vector<1x8x1xf32>,
    %c1_50 = arith.constant 1 : index
    %c0_51 = arith.constant 0 : index
    %c0_52 = arith.constant 0 : index
    %87 = vector.load %arg2[%c1_50, %c0_51, %c0_52] : memref<2x8x16xf32, #tpu.memory_space<vmem>>, vector<1x8x16xf32>
    %88 = vector.shape_cast %87 : vector<1x8x16xf32> to vector<8x16xf32>
    %c1_53 = arith.constant 1 : index
    %89 = arith.index_cast %1 : i32 to index
    %c0_54 = arith.constant 0 : index
    %90 = vector.load %arg2[%c1_53, %89, %c0_54] : memref<2x8x16xf32, #tpu.memory_space<vmem>>, vector<1x8x16xf32>
    %91 = vector.shape_cast %90 : vector<1x8x16xf32> to vector<8x16xf32>
    %c1_55 = arith.constant 1 : index
    %c0_56 = arith.constant 0 : index
    %c0_57 = arith.constant 0 : index
    %92 = vector.load %arg3[%c1_55, %c0_56, %c0_57] : memref<2x2x8xf32, #tpu.memory_space<vmem>>, vector<1x2x8xf32>
    %93 = vector.shape_cast %92 : vector<1x2x8xf32> to vector<2x8xf32>
    %cst_58 = arith.constant dense<0.000000e+00> : vector<8x2xf32>
    %94 = tpu.matmul %91, %8, %cst_58 {dimension_numbers = #tpu.dot_dimension_numbers<[1], [0], [0], [1], [0, 0, 1, 1], [], []>} : vector<8x16xf32>, vector<16x2xf32>, vector<8x2xf32> -> vector<8x2xf32>
    %95 = vector.broadcast %9 : vector<1x2xf32> to vector<8x2xf32>
    %96 = arith.addf %94, %95 : vector<8x2xf32>
    %97 = math.tanh %96 : vector<8x2xf32>
    %cst_59 = arith.constant 5.000000e-01 : f32
    %98 = vector.broadcast %cst_59 : f32 to vector<8x2xf32>
    %99 = arith.mulf %97, %98 : vector<8x2xf32>
    %cst_60 = arith.constant dense<0.000000e+00> : vector<8x16xf32>
    %100 = tpu.matmul %2, %88, %cst_60 {dimension_numbers = #tpu.dot_dimension_numbers<[1], [0], [0], [1], [0, 0, 1, 1], [], []>} : vector<8x8xf32>, vector<8x16xf32>, vector<8x16xf32> -> vector<8x16xf32>
    %cst_61 = arith.constant dense<0.000000e+00> : vector<8x8xf32>
    %101 = tpu.matmul %100, %4, %cst_61 {dimension_numbers = #tpu.dot_dimension_numbers<[1], [0], [0], [1], [0, 0, 1, 1], [], []>} : vector<8x16xf32>, vector<16x8xf32>, vector<8x8xf32> -> vector<8x8xf32>
    %102 = arith.addf %101, %6 : vector<8x8xf32>
    %cst_62 = arith.constant dense<0xFF800000> : vector<8xf32>
    %103 = vector.multi_reduction <maximumf>, %102, %cst_62 [1] : vector<8x8xf32> to vector<8xf32>
    %104 = vector.shape_cast %103 : vector<8xf32> to vector<8x1xf32>
    %105 = vector.broadcast %104 : vector<8x1xf32> to vector<8x8xf32>
    %106 = arith.subf %102, %105 : vector<8x8xf32>
    %107 = math.exp %106 : vector<8x8xf32>
    %cst_63 = arith.constant dense<0.000000e+00> : vector<8xf32>
    %108 = vector.multi_reduction <add>, %107, %cst_63 [1] : vector<8x8xf32> to vector<8xf32>
    %109 = vector.shape_cast %108 : vector<8xf32> to vector<8x1xf32>
    %110 = tpu.reciprocal %109 {approx = true} : vector<8x1xf32> -> vector<8x1xf32>
    %111 = arith.mulf %109, %110 : vector<8x1xf32>
    %cst_64 = arith.constant 2.000000e+00 : f32
    %112 = vector.broadcast %cst_64 : f32 to vector<8x1xf32>
    %113 = arith.subf %112, %111 : vector<8x1xf32>
    %114 = arith.mulf %110, %113 : vector<8x1xf32>
    %115 = vector.broadcast %114 : vector<8x1xf32> to vector<8x8xf32>
    %116 = arith.mulf %107, %115 : vector<8x8xf32>
    %cst_65 = arith.constant dense<0.000000e+00> : vector<8x16xf32>
    %117 = tpu.matmul %3, %88, %cst_65 {dimension_numbers = #tpu.dot_dimension_numbers<[1], [0], [0], [1], [0, 0, 1, 1], [], []>} : vector<8x8xf32>, vector<8x16xf32>, vector<8x16xf32> -> vector<8x16xf32>
    %cst_66 = arith.constant dense<0.000000e+00> : vector<8x8xf32>
    %118 = tpu.matmul %117, %5, %cst_66 {dimension_numbers = #tpu.dot_dimension_numbers<[1], [0], [0], [1], [0, 0, 1, 1], [], []>} : vector<8x16xf32>, vector<16x8xf32>, vector<8x8xf32> -> vector<8x8xf32>
    %119 = arith.addf %118, %7 : vector<8x8xf32>
    %cst_67 = arith.constant dense<0xFF800000> : vector<8xf32>
    %120 = vector.multi_reduction <maximumf>, %119, %cst_67 [1] : vector<8x8xf32> to vector<8xf32>
    %121 = vector.shape_cast %120 : vector<8xf32> to vector<8x1xf32>
    %122 = vector.broadcast %121 : vector<8x1xf32> to vector<8x8xf32>
    %123 = arith.subf %119, %122 : vector<8x8xf32>
    %124 = math.exp %123 : vector<8x8xf32>
    %cst_68 = arith.constant dense<0.000000e+00> : vector<8xf32>
    %125 = vector.multi_reduction <add>, %124, %cst_68 [1] : vector<8x8xf32> to vector<8xf32>
    %126 = vector.shape_cast %125 : vector<8xf32> to vector<8x1xf32>
    %127 = tpu.reciprocal %126 {approx = true} : vector<8x1xf32> -> vector<8x1xf32>
    %128 = arith.mulf %126, %127 : vector<8x1xf32>
    %cst_69 = arith.constant 2.000000e+00 : f32
    %129 = vector.broadcast %cst_69 : f32 to vector<8x1xf32>
    %130 = arith.subf %129, %128 : vector<8x1xf32>
    %131 = arith.mulf %127, %130 : vector<8x1xf32>
    %132 = vector.broadcast %131 : vector<8x1xf32> to vector<8x8xf32>
    %133 = arith.mulf %124, %132 : vector<8x8xf32>
    %134 = vector.extract_strided_slice %93 {offsets = [0, 0], sizes = [1, 8], strides = [1, 1]} : vector<2x8xf32> to vector<1x8xf32>
    %135 = vector.broadcast %134 : vector<1x8xf32> to vector<8x8xf32>
    %136 = arith.mulf %116, %135 : vector<8x8xf32>
    %cst_70 = arith.constant dense<0.000000e+00> : vector<8xf32>
    %137 = vector.multi_reduction <add>, %136, %cst_70 [1] : vector<8x8xf32> to vector<8xf32>
    %138 = vector.shape_cast %137 : vector<8xf32> to vector<8x1xf32>
    %139 = vector.extract_strided_slice %93 {offsets = [1, 0], sizes = [1, 8], strides = [1, 1]} : vector<2x8xf32> to vector<1x8xf32>
    %140 = vector.broadcast %139 : vector<1x8xf32> to vector<8x8xf32>
    %141 = arith.mulf %133, %140 : vector<8x8xf32>
    %cst_71 = arith.constant dense<0.000000e+00> : vector<8xf32>
    %142 = vector.multi_reduction <add>, %141, %cst_71 [1] : vector<8x8xf32> to vector<8xf32>
    %143 = vector.shape_cast %142 : vector<8xf32> to vector<8x1xf32>
    %c1_72 = arith.constant 1 : index
    %c0_73 = arith.constant 0 : index
    %c0_74 = arith.constant 0 : index
    %144 = vector.load %arg13[%c1_72, %c0_73, %c0_74] : memref<2x8x8xf32, #tpu.memory_space<vmem>>, vector<1x8x8xf32>
    %145 = vector.shape_cast %144 : vector<1x8x8xf32> to vector<8x8xf32>
    %146 = vector.shape_cast %116 : vector<8x8xf32> to vector<1x8x8xf32>
    tpu.vector_store %arg13[%c1_72, %c0_73, %c0_74], %146 {strides = array<i32>} : memref<2x8x8xf32, #tpu.memory_space<vmem>>, vector<1x8x8xf32>,
    %c1_75 = arith.constant 1 : index
    %c0_76 = arith.constant 0 : index
    %c0_77 = arith.constant 0 : index
    %147 = vector.load %arg14[%c1_75, %c0_76, %c0_77] : memref<2x8x8xf32, #tpu.memory_space<vmem>>, vector<1x8x8xf32>
    %148 = vector.shape_cast %147 : vector<1x8x8xf32> to vector<8x8xf32>
    %149 = vector.shape_cast %133 : vector<8x8xf32> to vector<1x8x8xf32>
    tpu.vector_store %arg14[%c1_75, %c0_76, %c0_77], %149 {strides = array<i32>} : memref<2x8x8xf32, #tpu.memory_space<vmem>>, vector<1x8x8xf32>,
    %150 = vector.extract_strided_slice %99 {offsets = [0, 0], sizes = [8, 1], strides = [1, 1]} : vector<8x2xf32> to vector<8x1xf32>
    %151 = arith.addf %138, %150 : vector<8x1xf32>
    %c1_78 = arith.constant 1 : index
    %c0_79 = arith.constant 0 : index
    %c0_80 = arith.constant 0 : index
    %152 = vector.load %arg12[%c1_78, %c0_79, %c0_80] : memref<2x8x2xf32, #tpu.memory_space<vmem>>, vector<1x8x1xf32>
    %153 = vector.shape_cast %152 : vector<1x8x1xf32> to vector<8x1xf32>
    %154 = vector.shape_cast %151 : vector<8x1xf32> to vector<1x8x1xf32>
    tpu.vector_store %arg12[%c1_78, %c0_79, %c0_80], %154 {strides = array<i32>} : memref<2x8x2xf32, #tpu.memory_space<vmem>>, vector<1x8x1xf32>,
    %155 = vector.extract_strided_slice %99 {offsets = [0, 1], sizes = [8, 1], strides = [1, 1]} : vector<8x2xf32> to vector<8x1xf32>
    %156 = arith.addf %143, %155 : vector<8x1xf32>
    %c1_81 = arith.constant 1 : index
    %c0_82 = arith.constant 0 : index
    %c1_83 = arith.constant 1 : index
    %157 = vector.load %arg12[%c1_81, %c0_82, %c1_83] : memref<2x8x2xf32, #tpu.memory_space<vmem>>, vector<1x8x1xf32>
    %158 = vector.shape_cast %157 : vector<1x8x1xf32> to vector<8x1xf32>
    %159 = vector.shape_cast %156 : vector<8x1xf32> to vector<1x8x1xf32>
    tpu.vector_store %arg12[%c1_81, %c0_82, %c1_83], %159 {strides = array<i32>} : memref<2x8x2xf32, #tpu.memory_space<vmem>>, vector<1x8x1xf32>,
    %160 = vector.extract_strided_slice %99 {offsets = [0, 1], sizes = [8, 1], strides = [1, 1]} : vector<8x2xf32> to vector<8x1xf32>
    %c1_84 = arith.constant 1 : index
    %c0_85 = arith.constant 0 : index
    %c0_86 = arith.constant 0 : index
    %161 = vector.load %arg15[%c1_84, %c0_85, %c0_86] : memref<2x8x1xf32, #tpu.memory_space<vmem>>, vector<1x8x1xf32>
    %162 = vector.shape_cast %161 : vector<1x8x1xf32> to vector<8x1xf32>
    %163 = vector.shape_cast %160 : vector<8x1xf32> to vector<1x8x1xf32>
    tpu.vector_store %arg15[%c1_84, %c0_85, %c0_86], %163 {strides = array<i32>} : memref<2x8x1xf32, #tpu.memory_space<vmem>>, vector<1x8x1xf32>,
    return
  }
  func.func @transform_0(%arg0: i32, %arg1: i32) -> (i32, i32, i32) {
    %c0_i32 = arith.constant 0 : i32
    %c0_i32_0 = arith.constant 0 : i32
    %c0_i32_1 = arith.constant 0 : i32
    return %arg1, %c0_i32, %c0_i32_0 : i32, i32, i32
  }
  func.func @transform_1(%arg0: i32, %arg1: i32) -> (i32, i32, i32) {
    %c0_i32 = arith.constant 0 : i32
    %c0_i32_0 = arith.constant 0 : i32
    %c0_i32_1 = arith.constant 0 : i32
    return %arg1, %c0_i32, %c0_i32_0 : i32, i32, i32
  }
  func.func @transform_2(%arg0: i32, %arg1: i32) -> (i32, i32) {
    %c0_i32 = arith.constant 0 : i32
    %c0_i32_0 = arith.constant 0 : i32
    return %arg0, %c0_i32 : i32, i32
  }
  func.func @transform_3(%arg0: i32, %arg1: i32) -> (i32, i32) {
    %c0_i32 = arith.constant 0 : i32
    %c0_i32_0 = arith.constant 0 : i32
    return %arg0, %c0_i32 : i32, i32
  }
  func.func @transform_4(%arg0: i32, %arg1: i32) -> (i32, i32) {
    %c0_i32 = arith.constant 0 : i32
    %c0_i32_0 = arith.constant 0 : i32
    %c0_i32_1 = arith.constant 0 : i32
    return %c0_i32, %c0_i32_0 : i32, i32
  }
  func.func @transform_5(%arg0: i32, %arg1: i32) -> (i32, i32) {
    %c0_i32 = arith.constant 0 : i32
    %c0_i32_0 = arith.constant 0 : i32
    %c0_i32_1 = arith.constant 0 : i32
    return %c0_i32, %c0_i32_0 : i32, i32
  }
  func.func @transform_6(%arg0: i32, %arg1: i32) -> (i32, i32) {
    %c0_i32 = arith.constant 0 : i32
    %c0_i32_0 = arith.constant 0 : i32
    return %arg0, %c0_i32 : i32, i32
  }
  func.func @transform_7(%arg0: i32, %arg1: i32) -> (i32, i32) {
    %c0_i32 = arith.constant 0 : i32
    %c0_i32_0 = arith.constant 0 : i32
    return %arg0, %c0_i32 : i32, i32
  }
  func.func @transform_8(%arg0: i32, %arg1: i32) -> (i32, i32) {
    %c0_i32 = arith.constant 0 : i32
    %c0_i32_0 = arith.constant 0 : i32
    %c0_i32_1 = arith.constant 0 : i32
    return %c0_i32, %c0_i32_0 : i32, i32
  }
  func.func @transform_9(%arg0: i32, %arg1: i32) -> (i32, i32) {
    %c0_i32 = arith.constant 0 : i32
    %c0_i32_0 = arith.constant 0 : i32
    %c0_i32_1 = arith.constant 0 : i32
    return %c0_i32, %c0_i32_0 : i32, i32
  }
  func.func @transform_10(%arg0: i32, %arg1: i32) -> (i32, i32, i32) {
    %c0_i32 = arith.constant 0 : i32
    %c0_i32_0 = arith.constant 0 : i32
    return %arg1, %arg0, %c0_i32 : i32, i32, i32
  }
  func.func @transform_11(%arg0: i32, %arg1: i32) -> (i32, i32, i32) {
    %c0_i32 = arith.constant 0 : i32
    %c0_i32_0 = arith.constant 0 : i32
    return %arg1, %arg0, %c0_i32 : i32, i32, i32
  }
  func.func @transform_12(%arg0: i32, %arg1: i32) -> (i32, i32, i32) {
    %c0_i32 = arith.constant 0 : i32
    %c0_i32_0 = arith.constant 0 : i32
    return %arg1, %arg0, %c0_i32 : i32, i32, i32
  }
  func.func @transform_13(%arg0: i32, %arg1: i32) -> (i32, i32, i32) {
    %c0_i32 = arith.constant 0 : i32
    %c0_i32_0 = arith.constant 0 : i32
    return %arg1, %arg0, %c0_i32 : i32, i32, i32
  }
}

</mosaic_0001>

<llo_original>
// kernel: double_dgc_forward.1
$region0: #{double_dgc_forward.1}
  #allocation0 [shape = 'u32[]', space=smem, size = 0x4, offset = 0x4, fixed_abs, tag = 'smem constant byte address 0x4 - core index']
  #allocation1 [shape = 'u32[144,128]{1,0:T(1,128)}', space=vmem, size = 0x12000, scoped, tag = 'internal scratch']
  %s0 = inlined_call_operand.vmem [shape: f32[2,8,16], index: 0, kind: input, shape index: {}]
  %s1 = inlined_call_operand.vmem [shape: f32[2,2,8], index: 1, kind: input, shape index: {}]
  %s2 = inlined_call_operand.vmem [shape: f32[8,8], index: 2, kind: input, shape index: {}]
  %s3 = inlined_call_operand.vmem [shape: f32[8,8], index: 3, kind: input, shape index: {}]
  %s4 = inlined_call_operand.vmem [shape: f32[16,8], index: 4, kind: input, shape index: {}]
  %s5 = inlined_call_operand.vmem [shape: f32[16,8], index: 5, kind: input, shape index: {}]
  %s6 = inlined_call_operand.vmem [shape: f32[8,8], index: 6, kind: input, shape index: {}]
  %s7 = inlined_call_operand.vmem [shape: f32[8,8], index: 7, kind: input, shape index: {}]
  %s8 = inlined_call_operand.vmem [shape: f32[16,2], index: 8, kind: input, shape index: {}]
  %s9 = inlined_call_operand.vmem [shape: f32[1,2], index: 9, kind: input, shape index: {}]
  %s10 = inlined_call_operand.vmem [shape: f32[2,8,2], index: 10, kind: output, shape index: {0}]
  %s11 = inlined_call_operand.hbm [shape: f32[2,8,8], index: 11, kind: output, shape index: {1}]
  %s12 = inlined_call_operand.hbm [shape: f32[2,8,8], index: 12, kind: output, shape index: {2}]
  %s13 = inlined_call_operand.vmem [shape: f32[2,8,1], index: 13, kind: output, shape index: {3}]
  %14 = xla_tuple %s10, %s11, %s12, %s13
  %s15 = sld [smem:[#allocation0]]
  $region74: #{double_dgc_forward.1} parent=0
    _
  %s17 = ssub.s32 1, %s15
  %s18 = scalar_select 0, %s17, %s15
  $region1: #{double_dgc_forward.1} parent=0
    #allocation2 [shape = 'u8[8192]{0}', space=vmem, size = 0x2000, scoped, tag = 'output window, operand 1, single buffered']
    #allocation3 [shape = 's32[1]{0}', space=sflag, size = 0x4, scoped, tag = 'scoped memory for double_dgc_forward.1']
    #allocation4 [shape = 'u8[8192]{0}', space=vmem, size = 0x2000, scoped, tag = 'output window, operand 2, single buffered']
    #allocation5 [shape = 's32[1]{0}', space=sflag, size = 0x4, scoped, tag = 'scoped memory for double_dgc_forward.1']
    %19 = vsyncpa [#allocation3], 0
    %20 = vsyncpa [#allocation5], 0
    // Predicated region
    $region2: #{double_dgc_forward.1} parent=1 // pred_check
      _
    $region3: #{double_dgc_forward.1} parent=1 // pred_check_branch
      %22 = sbr.rel (0) target = $region5
    $region4: #{double_dgc_forward.1} parent=1 // pred_region
      _
    $region5: #{double_dgc_forward.1} parent=1 // pred_fallthru
      _
    // Predicated region
    $region6: #{double_dgc_forward.1} parent=1 // pred_check
      _
    $region7: #{double_dgc_forward.1} parent=1 // pred_check_branch
      %24 = sbr.rel (0) target = $region9
    $region8: #{double_dgc_forward.1} parent=1 // pred_region
      _
    $region9: #{double_dgc_forward.1} parent=1 // pred_fallthru
      _
    // Predicated region
    $region10: #{double_dgc_forward.1} parent=1 // pred_check
      _
    $region11: #{double_dgc_forward.1} parent=1 // pred_check_branch
      %26 = sbr.rel (0) target = $region13
    $region12: #{double_dgc_forward.1} parent=1 // pred_region
      _
    $region13: #{double_dgc_forward.1} parent=1 // pred_fallthru
      _
    // Predicated region
    $region14: #{double_dgc_forward.1} parent=1 // pred_check
      _
    $region15: #{double_dgc_forward.1} parent=1 // pred_check_branch
      %28 = sbr.rel (0) target = $region17
    $region16: #{double_dgc_forward.1} parent=1 // pred_region
      _
    $region17: #{double_dgc_forward.1} parent=1 // pred_fallthru
      _
    // Predicated region
    $region18: #{double_dgc_forward.1} parent=1 // pred_check
      _
    $region19: #{double_dgc_forward.1} parent=1 // pred_check_branch
      %30 = sbr.rel (0) target = $region21
    $region20: #{double_dgc_forward.1} parent=1 // pred_region
      _
    $region21: #{double_dgc_forward.1} parent=1 // pred_fallthru
      _
    // Predicated region
    $region22: #{double_dgc_forward.1} parent=1 // pred_check
      _
    $region23: #{double_dgc_forward.1} parent=1 // pred_check_branch
      %32 = sbr.rel (0) target = $region25
    $region24: #{double_dgc_forward.1} parent=1 // pred_region
      _
    $region25: #{double_dgc_forward.1} parent=1 // pred_fallthru
      _
    // Predicated region
    $region26: #{double_dgc_forward.1} parent=1 // pred_check
      _
    $region27: #{double_dgc_forward.1} parent=1 // pred_check_branch
      %34 = sbr.rel (0) target = $region29
    $region28: #{double_dgc_forward.1} parent=1 // pred_region
      _
    $region29: #{double_dgc_forward.1} parent=1 // pred_fallthru
      _
    // Predicated region
    $region30: #{double_dgc_forward.1} parent=1 // pred_check
      _
    $region31: #{double_dgc_forward.1} parent=1 // pred_check_branch
      %36 = sbr.rel (0) target = $region33
    $region32: #{double_dgc_forward.1} parent=1 // pred_region
      _
    $region33: #{double_dgc_forward.1} parent=1 // pred_fallthru
      _
    // Predicated region
    $region34: #{double_dgc_forward.1} parent=1 // pred_check
      _
    $region35: #{double_dgc_forward.1} parent=1 // pred_check_branch
      %38 = sbr.rel (0) target = $region37
    $region36: #{double_dgc_forward.1} parent=1 // pred_region
      _
    $region37: #{double_dgc_forward.1} parent=1 // pred_fallthru
      _
    // Predicated region
    $region38: #{double_dgc_forward.1} parent=1 // pred_check
      _
    $region39: #{double_dgc_forward.1} parent=1 // pred_check_branch
      %40 = sbr.rel (0) target = $region41
    $region40: #{double_dgc_forward.1} parent=1 // pred_region
      _
    $region41: #{double_dgc_forward.1} parent=1 // pred_fallthru
      _
    %s41 = smul.u32 0, 8
    %v42 = vld [vmem:[%s2] sm:$0xff]
    %v43 = vld [vmem:[%s3] sm:$0xff]
    %v44 = vld [vmem:[%s4] sm:$0xff]
    %v45 = vld [vmem:[%s4 + $0x8] sm:$0xff]
    %v46 = vld [vmem:[%s5] sm:$0xff]
    %v47 = vld [vmem:[%s5 + $0x8] sm:$0xff]
    %v48 = vld [vmem:[%s6] sm:$0xff]
    %v49 = vld [vmem:[%s7] sm:$0xff]
    %v50 = vld [vmem:[%s8] sm:$0xff]
    %v51 = vld [vmem:[%s8 + $0x8] sm:$0xff]
    %v52 = vld [vmem:[%s9] sm:$0x1]
    %v53 = vld [vmem:[%s0] sm:$0xff]
    %s54 = scalar_lea.vmem %s0, %s41
    %v55 = vld [vmem:[%s54] sm:$0xff]
    %v56 = vld [vmem:[%s1] sm:$0x3]
    %v58 = vlaneseq
    %v59 = vshrl.u32 %v58, 7
    %v60 = vsub.s32 0, %v59
    %v61 = vrot.slane %v52, %v60
    %vm63 = vcmask 130048
    %v65 = vsel %vm63, %v55, 0
    %67 = vmatprep.subr.mxu0 0.0
    %68 = vmatpush1.msra.mxu0 %v50
    %69 = vmatprep.subr.mxu0 0.0
    %70 = vmatpush1.msra.mxu0 %v51
    %71 = vmatprep.subr.mxu0 0.0
    %72 = vmatpush1.msra.mxu0 0.0
    %73 = vmatprep.subr.mxu0 0.0
    %74 = vmatpush1.msra.mxu0 0.0
    %75 = vmatprep.subr.mxu0 0.0
    %76 = vmatpush1.msra.mxu0 0.0
    %77 = vmatprep.subr.mxu0 0.0
    %78 = vmatpush1.msra.mxu0 0.0
    %79 = vmatprep.subr.mxu0 0.0
    %80 = vmatpush1.msra.mxu0 0.0
    %81 = vmatprep.subr.mxu0 0.0
    %82 = vmatpush1.msra.mxu0 0.0
    %83 = vmatprep.subr.mxu0 0.0
    %84 = vmatpush1.msra.mxu0 0.0
    %85 = vmatprep.subr.mxu0 0.0
    %86 = vmatpush1.msra.mxu0 0.0
    %87 = vmatprep.subr.mxu0 0.0
    %88 = vmatpush1.msra.mxu0 0.0
    %89 = vmatprep.subr.mxu0 0.0
    %90 = vmatpush1.msra.mxu0 0.0
    %91 = vmatprep.subr.mxu0 0.0
    %92 = vmatpush1.msra.mxu0 0.0
    %93 = vmatprep.subr.mxu0 0.0
    %94 = vmatpush1.msra.mxu0 0.0
    %95 = vmatprep.subr.mxu0 0.0
    %96 = vmatpush1.msra.mxu0 0.0
    %97 = vmatprep.subr.mxu0 0.0
    %98 = vmatpush1.msra.mxu0 0.0
    %99 = vmatprep.subr.mxu0 0.0
    %100 = vmatpush1.msra.mxu0 0.0
    %101 = vmatprep.subr.mxu0 0.0
    %102 = vmatpush1.msra.mxu0 0.0
    %103 = vmatprep.subr.mxu0 0.0
    %104 = vmatpush1.msra.mxu0 0.0
    %105 = vmatprep.subr.mxu0 0.0
    %106 = vmatpush1.msra.mxu0 0.0
    %107 = vmatprep.subr.mxu0 0.0
    %108 = vmatpush1.msra.mxu0 0.0
    %109 = vmatprep.subr.mxu0 0.0
    %110 = vmatpush1.msra.mxu0 0.0
    %111 = vmatprep.subr.mxu0 0.0
    %112 = vmatpush1.msra.mxu0 0.0
    %113 = vmatprep.subr.mxu0 0.0
    %114 = vmatpush1.msra.mxu0 0.0
    %115 = vmatprep.subr.mxu0 0.0
    %116 = vmatpush1.msra.mxu0 0.0
    %117 = vmatprep.subr.mxu0 0.0
    %118 = vmatpush1.msra.mxu0 0.0
    %119 = vmatprep.subr.mxu0 0.0
    %120 = vmatpush1.msra.mxu0 0.0
    %121 = vmatprep.subr.mxu0 0.0
    %122 = vmatpush1.msra.mxu0 0.0
    %123 = vmatprep.subr.mxu0 0.0
    %124 = vmatpush1.msra.mxu0 0.0
    %125 = vmatprep.subr.mxu0 0.0
    %126 = vmatpush1.msra.mxu0 0.0
    %127 = vmatprep.subr.mxu0 0.0
    %128 = vmatpush1.msra.mxu0 0.0
    %129 = vmatprep.subr.mxu0 0.0
    %130 = vmatpush1.msra.mxu0 0.0
    %131 = vmatprep.mubr.f32.mxu0 0.0
    %132 = vmatmul.mubr.f32.gmra.mrb[0].mxu0 %v65
    %v133 = vpop.f32.mrb[0].mxu0
    %v134 = vadd.f32 %v61, %v133
    %v135 = vpop.f32.mrb[0].mxu0
    %136 = vdwg.mxu0
    %v137 = vtanh.pop %v134
    %v138 = vmul.f32 %v137, 0.5
    %vm139 = vcmask 64512
    %v141 = vsel %vm139, %v42, 0
    %143 = vmatprep.subr.mxu0 0.0
    %144 = vmatpush1.msra.mxu0 %v53
    %145 = vmatprep.subr.mxu0 0.0
    %146 = vmatpush1.msra.mxu0 0.0
    %147 = vmatprep.subr.mxu0 0.0
    %148 = vmatpush1.msra.mxu0 0.0
    %149 = vmatprep.subr.mxu0 0.0
    %150 = vmatpush1.msra.mxu0 0.0
    %151 = vmatprep.subr.mxu0 0.0
    %152 = vmatpush1.msra.mxu0 0.0
    %153 = vmatprep.subr.mxu0 0.0
    %154 = vmatpush1.msra.mxu0 0.0
    %155 = vmatprep.subr.mxu0 0.0
    %156 = vmatpush1.msra.mxu0 0.0
    %157 = vmatprep.subr.mxu0 0.0
    %158 = vmatpush1.msra.mxu0 0.0
    %159 = vmatprep.subr.mxu0 0.0
    %160 = vmatpush1.msra.mxu0 0.0
    %161 = vmatprep.subr.mxu0 0.0
    %162 = vmatpush1.msra.mxu0 0.0
    %163 = vmatprep.subr.mxu0 0.0
    %164 = vmatpush1.msra.mxu0 0.0
    %165 = vmatprep.subr.mxu0 0.0
    %166 = vmatpush1.msra.mxu0 0.0
    %167 = vmatprep.subr.mxu0 0.0
    %168 = vmatpush1.msra.mxu0 0.0
    %169 = vmatprep.subr.mxu0 0.0
    %170 = vmatpush1.msra.mxu0 0.0
    %171 = vmatprep.subr.mxu0 0.0
    %172 = vmatpush1.msra.mxu0 0.0
    %173 = vmatprep.subr.mxu0 0.0
    %174 = vmatpush1.msra.mxu0 0.0
    %175 = vmatprep.subr.mxu0 0.0
    %176 = vmatpush1.msra.mxu0 0.0
    %177 = vmatprep.subr.mxu0 0.0
    %178 = vmatpush1.msra.mxu0 0.0
    %179 = vmatprep.subr.mxu0 0.0
    %180 = vmatpush1.msra.mxu0 0.0
    %181 = vmatprep.subr.mxu0 0.0
    %182 = vmatpush1.msra.mxu0 0.0
    %183 = vmatprep.subr.mxu0 0.0
    %184 = vmatpush1.msra.mxu0 0.0
    %185 = vmatprep.subr.mxu0 0.0
    %186 = vmatpush1.msra.mxu0 0.0
    %187 = vmatprep.subr.mxu0 0.0
    %188 = vmatpush1.msra.mxu0 0.0
    %189 = vmatprep.subr.mxu0 0.0
    %190 = vmatpush1.msra.mxu0 0.0
    %191 = vmatprep.subr.mxu0 0.0
    %192 = vmatpush1.msra.mxu0 0.0
    %193 = vmatprep.subr.mxu0 0.0
    %194 = vmatpush1.msra.mxu0 0.0
    %195 = vmatprep.subr.mxu0 0.0
    %196 = vmatpush1.msra.mxu0 0.0
    %197 = vmatprep.subr.mxu0 0.0
    %198 = vmatpush1.msra.mxu0 0.0
    %199 = vmatprep.subr.mxu0 0.0
    %200 = vmatpush1.msra.mxu0 0.0
    %201 = vmatprep.subr.mxu0 0.0
    %202 = vmatpush1.msra.mxu0 0.0
    %203 = vmatprep.subr.mxu0 0.0
    %204 = vmatpush1.msra.mxu0 0.0
    %205 = vmatprep.subr.mxu0 0.0
    %206 = vmatpush1.msra.mxu0 0.0
    %207 = vmatprep.mubr.f32.mxu0 0.0
    %208 = vmatmul.mubr.f32.gmra.mrb[0].mxu0 %v141
    %v209 = vpop.f32.mrb[0].mxu0
    %v210 = vadd.f32 0.0, %v209
    %v211 = vpop.f32.mrb[0].mxu0
    %212 = vdwg.mxu0
    %v214 = vsel %vm63, %v210, 0
    %216 = vmatprep.subr.mxu0 0.0
    %217 = vmatpush1.msra.mxu0 %v44
    %218 = vmatprep.subr.mxu0 0.0
    %219 = vmatpush1.msra.mxu0 %v45
    %220 = vmatprep.subr.mxu0 0.0
    %221 = vmatpush1.msra.mxu0 0.0
    %222 = vmatprep.subr.mxu0 0.0
    %223 = vmatpush1.msra.mxu0 0.0
    %224 = vmatprep.subr.mxu0 0.0
    %225 = vmatpush1.msra.mxu0 0.0
    %226 = vmatprep.subr.mxu0 0.0
    %227 = vmatpush1.msra.mxu0 0.0
    %228 = vmatprep.subr.mxu0 0.0
    %229 = vmatpush1.msra.mxu0 0.0
    %230 = vmatprep.subr.mxu0 0.0
    %231 = vmatpush1.msra.mxu0 0.0
    %232 = vmatprep.subr.mxu0 0.0
    %233 = vmatpush1.msra.mxu0 0.0
    %234 = vmatprep.subr.mxu0 0.0
    %235 = vmatpush1.msra.mxu0 0.0
    %236 = vmatprep.subr.mxu0 0.0
    %237 = vmatpush1.msra.mxu0 0.0
    %238 = vmatprep.subr.mxu0 0.0
    %239 = vmatpush1.msra.mxu0 0.0
    %240 = vmatprep.subr.mxu0 0.0
    %241 = vmatpush1.msra.mxu0 0.0
    %242 = vmatprep.subr.mxu0 0.0
    %243 = vmatpush1.msra.mxu0 0.0
    %244 = vmatprep.subr.mxu0 0.0
    %245 = vmatpush1.msra.mxu0 0.0
    %246 = vmatprep.subr.mxu0 0.0
    %247 = vmatpush1.msra.mxu0 0.0
    %248 = vmatprep.subr.mxu0 0.0
    %249 = vmatpush1.msra.mxu0 0.0
    %250 = vmatprep.subr.mxu0 0.0
    %251 = vmatpush1.msra.mxu0 0.0
    %252 = vmatprep.subr.mxu0 0.0
    %253 = vmatpush1.msra.mxu0 0.0
    %254 = vmatprep.subr.mxu0 0.0
    %255 = vmatpush1.msra.mxu0 0.0
    %256 = vmatprep.subr.mxu0 0.0
    %257 = vmatpush1.msra.mxu0 0.0
    %258 = vmatprep.subr.mxu0 0.0
    %259 = vmatpush1.msra.mxu0 0.0
    %260 = vmatprep.subr.mxu0 0.0
    %261 = vmatpush1.msra.mxu0 0.0
    %262 = vmatprep.subr.mxu0 0.0
    %263 = vmatpush1.msra.mxu0 0.0
    %264 = vmatprep.subr.mxu0 0.0
    %265 = vmatpush1.msra.mxu0 0.0
    %266 = vmatprep.subr.mxu0 0.0
    %267 = vmatpush1.msra.mxu0 0.0
    %268 = vmatprep.subr.mxu0 0.0
    %269 = vmatpush1.msra.mxu0 0.0
    %270 = vmatprep.subr.mxu0 0.0
    %271 = vmatpush1.msra.mxu0 0.0
    %272 = vmatprep.subr.mxu0 0.0
    %273 = vmatpush1.msra.mxu0 0.0
    %274 = vmatprep.subr.mxu0 0.0
    %275 = vmatpush1.msra.mxu0 0.0
    %276 = vmatprep.subr.mxu0 0.0
    %277 = vmatpush1.msra.mxu0 0.0
    %278 = vmatprep.subr.mxu0 0.0
    %279 = vmatpush1.msra.mxu0 0.0
    %280 = vmatprep.mubr.f32.mxu0 0.0
    %281 = vmatmul.mubr.f32.gmra.mrb[0].mxu0 %v214
    %v282 = vpop.f32.mrb[0].mxu0
    %v283 = vadd.f32 %v48, %v282
    %v284 = vpop.f32.mrb[0].mxu0
    %285 = vdwg.mxu0
    %v286 = vsel %vm139, %v283, -inf
    %287 = vmax.xlane.f32.xlu0 %v286
    %v288 = vpop.xlane.xlu0 %287
    %v289 = vsub.f32 %v283, %v288
    %v290 = vmul.f32 %v289, 1.442695
    %v291 = vpow.pop %v290
    %v292 = vsel %vm139, %v291, 0.0
    %293 = vadd.xlane.f32.xlu0 %v292
    %v294 = vpop.xlane.xlu0 %293
    %v295 = vrcp.pop %v294
    %v296 = vmul.f32 %v294, %v295
    %v297 = vsub.f32 2.0, %v296
    %v298 = vmul.f32 %v295, %v297
    %v299 = vmul.f32 %v291, %v298
    %v301 = vsel %vm139, %v43, 0
    %303 = vmatprep.subr.mxu0 0.0
    %304 = vmatpush1.msra.mxu0 %v53
    %305 = vmatprep.subr.mxu0 0.0
    %306 = vmatpush1.msra.mxu0 0.0
    %307 = vmatprep.subr.mxu0 0.0
    %308 = vmatpush1.msra.mxu0 0.0
    %309 = vmatprep.subr.mxu0 0.0
    %310 = vmatpush1.msra.mxu0 0.0
    %311 = vmatprep.subr.mxu0 0.0
    %312 = vmatpush1.msra.mxu0 0.0
    %313 = vmatprep.subr.mxu0 0.0
    %314 = vmatpush1.msra.mxu0 0.0
    %315 = vmatprep.subr.mxu0 0.0
    %316 = vmatpush1.msra.mxu0 0.0
    %317 = vmatprep.subr.mxu0 0.0
    %318 = vmatpush1.msra.mxu0 0.0
    %319 = vmatprep.subr.mxu0 0.0
    %320 = vmatpush1.msra.mxu0 0.0
    %321 = vmatprep.subr.mxu0 0.0
    %322 = vmatpush1.msra.mxu0 0.0
    %323 = vmatprep.subr.mxu0 0.0
    %324 = vmatpush1.msra.mxu0 0.0
    %325 = vmatprep.subr.mxu0 0.0
    %326 = vmatpush1.msra.mxu0 0.0
    %327 = vmatprep.subr.mxu0 0.0
    %328 = vmatpush1.msra.mxu0 0.0
    %329 = vmatprep.subr.mxu0 0.0
    %330 = vmatpush1.msra.mxu0 0.0
    %331 = vmatprep.subr.mxu0 0.0
    %332 = vmatpush1.msra.mxu0 0.0
    %333 = vmatprep.subr.mxu0 0.0
    %334 = vmatpush1.msra.mxu0 0.0
    %335 = vmatprep.subr.mxu0 0.0
    %336 = vmatpush1.msra.mxu0 0.0
    %337 = vmatprep.subr.mxu0 0.0
    %338 = vmatpush1.msra.mxu0 0.0
    %339 = vmatprep.subr.mxu0 0.0
    %340 = vmatpush1.msra.mxu0 0.0
    %341 = vmatprep.subr.mxu0 0.0
    %342 = vmatpush1.msra.mxu0 0.0
    %343 = vmatprep.subr.mxu0 0.0
    %344 = vmatpush1.msra.mxu0 0.0
    %345 = vmatprep.subr.mxu0 0.0
    %346 = vmatpush1.msra.mxu0 0.0
    %347 = vmatprep.subr.mxu0 0.0
    %348 = vmatpush1.msra.mxu0 0.0
    %349 = vmatprep.subr.mxu0 0.0
    %350 = vmatpush1.msra.mxu0 0.0
    %351 = vmatprep.subr.mxu0 0.0
    %352 = vmatpush1.msra.mxu0 0.0
    %353 = vmatprep.subr.mxu0 0.0
    %354 = vmatpush1.msra.mxu0 0.0
    %355 = vmatprep.subr.mxu0 0.0
    %356 = vmatpush1.msra.mxu0 0.0
    %357 = vmatprep.subr.mxu0 0.0
    %358 = vmatpush1.msra.mxu0 0.0
    %359 = vmatprep.subr.mxu0 0.0
    %360 = vmatpush1.msra.mxu0 0.0
    %361 = vmatprep.subr.mxu0 0.0
    %362 = vmatpush1.msra.mxu0 0.0
    %363 = vmatprep.subr.mxu0 0.0
    %364 = vmatpush1.msra.mxu0 0.0
    %365 = vmatprep.subr.mxu0 0.0
    %366 = vmatpush1.msra.mxu0 0.0
    %367 = vmatprep.mubr.f32.mxu0 0.0
    %368 = vmatmul.mubr.f32.gmra.mrb[0].mxu0 %v301
    %v369 = vpop.f32.mrb[0].mxu0
    %v370 = vadd.f32 0.0, %v369
    %v371 = vpop.f32.mrb[0].mxu0
    %372 = vdwg.mxu0
    %v374 = vsel %vm63, %v370, 0
    %376 = vmatprep.subr.mxu0 0.0
    %377 = vmatpush1.msra.mxu0 %v46
    %378 = vmatprep.subr.mxu0 0.0
    %379 = vmatpush1.msra.mxu0 %v47
    %380 = vmatprep.subr.mxu0 0.0
    %381 = vmatpush1.msra.mxu0 0.0
    %382 = vmatprep.subr.mxu0 0.0
    %383 = vmatpush1.msra.mxu0 0.0
    %384 = vmatprep.subr.mxu0 0.0
    %385 = vmatpush1.msra.mxu0 0.0
    %386 = vmatprep.subr.mxu0 0.0
    %387 = vmatpush1.msra.mxu0 0.0
    %388 = vmatprep.subr.mxu0 0.0
    %389 = vmatpush1.msra.mxu0 0.0
    %390 = vmatprep.subr.mxu0 0.0
    %391 = vmatpush1.msra.mxu0 0.0
    %392 = vmatprep.subr.mxu0 0.0
    %393 = vmatpush1.msra.mxu0 0.0
    %394 = vmatprep.subr.mxu0 0.0
    %395 = vmatpush1.msra.mxu0 0.0
    %396 = vmatprep.subr.mxu0 0.0
    %397 = vmatpush1.msra.mxu0 0.0
    %398 = vmatprep.subr.mxu0 0.0
    %399 = vmatpush1.msra.mxu0 0.0
    %400 = vmatprep.subr.mxu0 0.0
    %401 = vmatpush1.msra.mxu0 0.0
    %402 = vmatprep.subr.mxu0 0.0
    %403 = vmatpush1.msra.mxu0 0.0
    %404 = vmatprep.subr.mxu0 0.0
    %405 = vmatpush1.msra.mxu0 0.0
    %406 = vmatprep.subr.mxu0 0.0
    %407 = vmatpush1.msra.mxu0 0.0
    %408 = vmatprep.subr.mxu0 0.0
    %409 = vmatpush1.msra.mxu0 0.0
    %410 = vmatprep.subr.mxu0 0.0
    %411 = vmatpush1.msra.mxu0 0.0
    %412 = vmatprep.subr.mxu0 0.0
    %413 = vmatpush1.msra.mxu0 0.0
    %414 = vmatprep.subr.mxu0 0.0
    %415 = vmatpush1.msra.mxu0 0.0
    %416 = vmatprep.subr.mxu0 0.0
    %417 = vmatpush1.msra.mxu0 0.0
    %418 = vmatprep.subr.mxu0 0.0
    %419 = vmatpush1.msra.mxu0 0.0
    %420 = vmatprep.subr.mxu0 0.0
    %421 = vmatpush1.msra.mxu0 0.0
    %422 = vmatprep.subr.mxu0 0.0
    %423 = vmatpush1.msra.mxu0 0.0
    %424 = vmatprep.subr.mxu0 0.0
    %425 = vmatpush1.msra.mxu0 0.0
    %426 = vmatprep.subr.mxu0 0.0
    %427 = vmatpush1.msra.mxu0 0.0
    %428 = vmatprep.subr.mxu0 0.0
    %429 = vmatpush1.msra.mxu0 0.0
    %430 = vmatprep.subr.mxu0 0.0
    %431 = vmatpush1.msra.mxu0 0.0
    %432 = vmatprep.subr.mxu0 0.0
    %433 = vmatpush1.msra.mxu0 0.0
    %434 = vmatprep.subr.mxu0 0.0
    %435 = vmatpush1.msra.mxu0 0.0
    %436 = vmatprep.subr.mxu0 0.0
    %437 = vmatpush1.msra.mxu0 0.0
    %438 = vmatprep.subr.mxu0 0.0
    %439 = vmatpush1.msra.mxu0 0.0
    %440 = vmatprep.mubr.f32.mxu0 0.0
    %441 = vmatmul.mubr.f32.gmra.mrb[0].mxu0 %v374
    %v442 = vpop.f32.mrb[0].mxu0
    %v443 = vadd.f32 %v49, %v442
    %v444 = vpop.f32.mrb[0].mxu0
    %445 = vdwg.mxu0
    %v446 = vsel %vm139, %v443, -inf
    %447 = vmax.xlane.f32.xlu0 %v446
    %v448 = vpop.xlane.xlu0 %447
    %v449 = vsub.f32 %v443, %v448
    %v450 = vmul.f32 %v449, 1.442695
    %v451 = vpow.pop %v450
    %v452 = vsel %vm139, %v451, 0.0
    %453 = vadd.xlane.f32.xlu0 %v452
    %v454 = vpop.xlane.xlu0 %453
    %v455 = vrcp.pop %v454
    %v456 = vmul.f32 %v454, %v455
    %v457 = vsub.f32 2.0, %v456
    %v458 = vmul.f32 %v455, %v457
    %v459 = vmul.f32 %v451, %v458
    %v460 = vlaneseq
    %v461 = vshrl.u32 %v460, 7
    %v462 = vsub.s32 0, %v461
    %v463 = vrot.slane %v56, %v462
    %v464 = vmul.f32 %v299, %v463
    %v465 = vsel %vm139, %v464, 0.0
    %466 = vadd.xlane.f32.xlu0 %v465
    %v467 = vpop.xlane.xlu0 %466
    %v468 = vlaneseq
    %v469 = vshrl.u32 %v468, 7
    %v470 = vsub.s32 1, %v469
    %v471 = vrot.slane %v56, %v470
    %v472 = vmul.f32 %v459, %v471
    %v473 = vsel %vm139, %v472, 0.0
    %474 = vadd.xlane.f32.xlu0 %v473
    %v475 = vpop.xlane.xlu0 %474
    %476 = vst.msk [vmem:[#allocation2] sm:$0xff] %vm139, %v299
    %477 = vst.msk [vmem:[#allocation4] sm:$0xff] %vm139, %v459
    %v478 = vadd.f32 %v467, %v138
    %vm479 = vcmask 7168
    %480 = vst.msk [vmem:[%s10] sm:$0xff] %vm479, %v478
    %v481 = vadd.f32 %v475, %v138
    %vm482 = vcmask 15368
    %483 = vst.msk [vmem:[%s10] sm:$0xff] %vm482, %v481
    %485 = vrot.lane.b32.xlu0 %v138, 127
    %v486 = vpop.permute.xlu0 %485
    %488 = vst.msk [vmem:[%s13] sm:$0xff] %vm479, %v486
    %s489 = scalar_lea.vmem %s0, 8
    %v490 = vld [vmem:[%s489] sm:$0xff]
    %s491 = sadd.s32 %s41, 8
    %s492 = scalar_lea.vmem %s0, %s491
    %v493 = vld [vmem:[%s492] sm:$0xff]
    %s494 = scalar_lea.vmem %s1, 2
    %v495 = vld [vmem:[%s494] sm:$0x3]
    %v497 = vsel %vm63, %v493, 0
    %499 = vmatprep.subr.mxu0 0.0
    %500 = vmatpush1.msra.mxu0 %v50
    %501 = vmatprep.subr.mxu0 0.0
    %502 = vmatpush1.msra.mxu0 %v51
    %503 = vmatprep.subr.mxu0 0.0
    %504 = vmatpush1.msra.mxu0 0.0
    %505 = vmatprep.subr.mxu0 0.0
    %506 = vmatpush1.msra.mxu0 0.0
    %507 = vmatprep.subr.mxu0 0.0
    %508 = vmatpush1.msra.mxu0 0.0
    %509 = vmatprep.subr.mxu0 0.0
    %510 = vmatpush1.msra.mxu0 0.0
    %511 = vmatprep.subr.mxu0 0.0
    %512 = vmatpush1.msra.mxu0 0.0
    %513 = vmatprep.subr.mxu0 0.0
    %514 = vmatpush1.msra.mxu0 0.0
    %515 = vmatprep.subr.mxu0 0.0
    %516 = vmatpush1.msra.mxu0 0.0
    %517 = vmatprep.subr.mxu0 0.0
    %518 = vmatpush1.msra.mxu0 0.0
    %519 = vmatprep.subr.mxu0 0.0
    %520 = vmatpush1.msra.mxu0 0.0
    %521 = vmatprep.subr.mxu0 0.0
    %522 = vmatpush1.msra.mxu0 0.0
    %523 = vmatprep.subr.mxu0 0.0
    %524 = vmatpush1.msra.mxu0 0.0
    %525 = vmatprep.subr.mxu0 0.0
    %526 = vmatpush1.msra.mxu0 0.0
    %527 = vmatprep.subr.mxu0 0.0
    %528 = vmatpush1.msra.mxu0 0.0
    %529 = vmatprep.subr.mxu0 0.0
    %530 = vmatpush1.msra.mxu0 0.0
    %531 = vmatprep.subr.mxu0 0.0
    %532 = vmatpush1.msra.mxu0 0.0
    %533 = vmatprep.subr.mxu0 0.0
    %534 = vmatpush1.msra.mxu0 0.0
    %535 = vmatprep.subr.mxu0 0.0
    %536 = vmatpush1.msra.mxu0 0.0
    %537 = vmatprep.subr.mxu0 0.0
    %538 = vmatpush1.msra.mxu0 0.0
    %539 = vmatprep.subr.mxu0 0.0
    %540 = vmatpush1.msra.mxu0 0.0
    %541 = vmatprep.subr.mxu0 0.0
    %542 = vmatpush1.msra.mxu0 0.0
    %543 = vmatprep.subr.mxu0 0.0
    %544 = vmatpush1.msra.mxu0 0.0
    %545 = vmatprep.subr.mxu0 0.0
    %546 = vmatpush1.msra.mxu0 0.0
    %547 = vmatprep.subr.mxu0 0.0
    %548 = vmatpush1.msra.mxu0 0.0
    %549 = vmatprep.subr.mxu0 0.0
    %550 = vmatpush1.msra.mxu0 0.0
    %551 = vmatprep.subr.mxu0 0.0
    %552 = vmatpush1.msra.mxu0 0.0
    %553 = vmatprep.subr.mxu0 0.0
    %554 = vmatpush1.msra.mxu0 0.0
    %555 = vmatprep.subr.mxu0 0.0
    %556 = vmatpush1.msra.mxu0 0.0
    %557 = vmatprep.subr.mxu0 0.0
    %558 = vmatpush1.msra.mxu0 0.0
    %559 = vmatprep.subr.mxu0 0.0
    %560 = vmatpush1.msra.mxu0 0.0
    %561 = vmatprep.subr.mxu0 0.0
    %562 = vmatpush1.msra.mxu0 0.0
    %563 = vmatprep.mubr.f32.mxu0 0.0
    %564 = vmatmul.mubr.f32.gmra.mrb[0].mxu0 %v497
    %v565 = vpop.f32.mrb[0].mxu0
    %v566 = vadd.f32 %v61, %v565
    %v567 = vpop.f32.mrb[0].mxu0
    %568 = vdwg.mxu0
    %v569 = vtanh.pop %v566
    %v570 = vmul.f32 %v569, 0.5
    %571 = vmatprep.subr.mxu0 0.0
    %572 = vmatpush1.msra.mxu0 %v490
    %573 = vmatprep.subr.mxu0 0.0
    %574 = vmatpush1.msra.mxu0 0.0
    %575 = vmatprep.subr.mxu0 0.0
    %576 = vmatpush1.msra.mxu0 0.0
    %577 = vmatprep.subr.mxu0 0.0
    %578 = vmatpush1.msra.mxu0 0.0
    %579 = vmatprep.subr.mxu0 0.0
    %580 = vmatpush1.msra.mxu0 0.0
    %581 = vmatprep.subr.mxu0 0.0
    %582 = vmatpush1.msra.mxu0 0.0
    %583 = vmatprep.subr.mxu0 0.0
    %584 = vmatpush1.msra.mxu0 0.0
    %585 = vmatprep.subr.mxu0 0.0
    %586 = vmatpush1.msra.mxu0 0.0
    %587 = vmatprep.subr.mxu0 0.0
    %588 = vmatpush1.msra.mxu0 0.0
    %589 = vmatprep.subr.mxu0 0.0
    %590 = vmatpush1.msra.mxu0 0.0
    %591 = vmatprep.subr.mxu0 0.0
    %592 = vmatpush1.msra.mxu0 0.0
    %593 = vmatprep.subr.mxu0 0.0
    %594 = vmatpush1.msra.mxu0 0.0
    %595 = vmatprep.subr.mxu0 0.0
    %596 = vmatpush1.msra.mxu0 0.0
    %597 = vmatprep.subr.mxu0 0.0
    %598 = vmatpush1.msra.mxu0 0.0
    %599 = vmatprep.subr.mxu0 0.0
    %600 = vmatpush1.msra.mxu0 0.0
    %601 = vmatprep.subr.mxu0 0.0
    %602 = vmatpush1.msra.mxu0 0.0
    %603 = vmatprep.subr.mxu0 0.0
    %604 = vmatpush1.msra.mxu0 0.0
    %605 = vmatprep.subr.mxu0 0.0
    %606 = vmatpush1.msra.mxu0 0.0
    %607 = vmatprep.subr.mxu0 0.0
    %608 = vmatpush1.msra.mxu0 0.0
    %609 = vmatprep.subr.mxu0 0.0
    %610 = vmatpush1.msra.mxu0 0.0
    %611 = vmatprep.subr.mxu0 0.0
    %612 = vmatpush1.msra.mxu0 0.0
    %613 = vmatprep.subr.mxu0 0.0
    %614 = vmatpush1.msra.mxu0 0.0
    %615 = vmatprep.subr.mxu0 0.0
    %616 = vmatpush1.msra.mxu0 0.0
    %617 = vmatprep.subr.mxu0 0.0
    %618 = vmatpush1.msra.mxu0 0.0
    %619 = vmatprep.subr.mxu0 0.0
    %620 = vmatpush1.msra.mxu0 0.0
    %621 = vmatprep.subr.mxu0 0.0
    %622 = vmatpush1.msra.mxu0 0.0
    %623 = vmatprep.subr.mxu0 0.0
    %624 = vmatpush1.msra.mxu0 0.0
    %625 = vmatprep.subr.mxu0 0.0
    %626 = vmatpush1.msra.mxu0 0.0
    %627 = vmatprep.subr.mxu0 0.0
    %628 = vmatpush1.msra.mxu0 0.0
    %629 = vmatprep.subr.mxu0 0.0
    %630 = vmatpush1.msra.mxu0 0.0
    %631 = vmatprep.subr.mxu0 0.0
    %632 = vmatpush1.msra.mxu0 0.0
    %633 = vmatprep.subr.mxu0 0.0
    %634 = vmatpush1.msra.mxu0 0.0
    %635 = vmatprep.mubr.f32.mxu0 0.0
    %636 = vmatmul.mubr.f32.gmra.mrb[0].mxu0 %v141
    %v637 = vpop.f32.mrb[0].mxu0
    %v638 = vadd.f32 0.0, %v637
    %v639 = vpop.f32.mrb[0].mxu0
    %640 = vdwg.mxu0
    %v642 = vsel %vm63, %v638, 0
    %644 = vmatprep.subr.mxu0 0.0
    %645 = vmatpush1.msra.mxu0 %v44
    %646 = vmatprep.subr.mxu0 0.0
    %647 = vmatpush1.msra.mxu0 %v45
    %648 = vmatprep.subr.mxu0 0.0
    %649 = vmatpush1.msra.mxu0 0.0
    %650 = vmatprep.subr.mxu0 0.0
    %651 = vmatpush1.msra.mxu0 0.0
    %652 = vmatprep.subr.mxu0 0.0
    %653 = vmatpush1.msra.mxu0 0.0
    %654 = vmatprep.subr.mxu0 0.0
    %655 = vmatpush1.msra.mxu0 0.0
    %656 = vmatprep.subr.mxu0 0.0
    %657 = vmatpush1.msra.mxu0 0.0
    %658 = vmatprep.subr.mxu0 0.0
    %659 = vmatpush1.msra.mxu0 0.0
    %660 = vmatprep.subr.mxu0 0.0
    %661 = vmatpush1.msra.mxu0 0.0
    %662 = vmatprep.subr.mxu0 0.0
    %663 = vmatpush1.msra.mxu0 0.0
    %664 = vmatprep.subr.mxu0 0.0
    %665 = vmatpush1.msra.mxu0 0.0
    %666 = vmatprep.subr.mxu0 0.0
    %667 = vmatpush1.msra.mxu0 0.0
    %668 = vmatprep.subr.mxu0 0.0
    %669 = vmatpush1.msra.mxu0 0.0
    %670 = vmatprep.subr.mxu0 0.0
    %671 = vmatpush1.msra.mxu0 0.0
    %672 = vmatprep.subr.mxu0 0.0
    %673 = vmatpush1.msra.mxu0 0.0
    %674 = vmatprep.subr.mxu0 0.0
    %675 = vmatpush1.msra.mxu0 0.0
    %676 = vmatprep.subr.mxu0 0.0
    %677 = vmatpush1.msra.mxu0 0.0
    %678 = vmatprep.subr.mxu0 0.0
    %679 = vmatpush1.msra.mxu0 0.0
    %680 = vmatprep.subr.mxu0 0.0
    %681 = vmatpush1.msra.mxu0 0.0
    %682 = vmatprep.subr.mxu0 0.0
    %683 = vmatpush1.msra.mxu0 0.0
    %684 = vmatprep.subr.mxu0 0.0
    %685 = vmatpush1.msra.mxu0 0.0
    %686 = vmatprep.subr.mxu0 0.0
    %687 = vmatpush1.msra.mxu0 0.0
    %688 = vmatprep.subr.mxu0 0.0
    %689 = vmatpush1.msra.mxu0 0.0
    %690 = vmatprep.subr.mxu0 0.0
    %691 = vmatpush1.msra.mxu0 0.0
    %692 = vmatprep.subr.mxu0 0.0
    %693 = vmatpush1.msra.mxu0 0.0
    %694 = vmatprep.subr.mxu0 0.0
    %695 = vmatpush1.msra.mxu0 0.0
    %696 = vmatprep.subr.mxu0 0.0
    %697 = vmatpush1.msra.mxu0 0.0
    %698 = vmatprep.subr.mxu0 0.0
    %699 = vmatpush1.msra.mxu0 0.0
    %700 = vmatprep.subr.mxu0 0.0
    %701 = vmatpush1.msra.mxu0 0.0
    %702 = vmatprep.subr.mxu0 0.0
    %703 = vmatpush1.msra.mxu0 0.0
    %704 = vmatprep.subr.mxu0 0.0
    %705 = vmatpush1.msra.mxu0 0.0
    %706 = vmatprep.subr.mxu0 0.0
    %707 = vmatpush1.msra.mxu0 0.0
    %708 = vmatprep.mubr.f32.mxu0 0.0
    %709 = vmatmul.mubr.f32.gmra.mrb[0].mxu0 %v642
    %v710 = vpop.f32.mrb[0].mxu0
    %v711 = vadd.f32 %v48, %v710
    %v712 = vpop.f32.mrb[0].mxu0
    %713 = vdwg.mxu0
    %v714 = vsel %vm139, %v711, -inf
    %715 = vmax.xlane.f32.xlu0 %v714
    %v716 = vpop.xlane.xlu0 %715
    %v717 = vsub.f32 %v711, %v716
    %v718 = vmul.f32 %v717, 1.442695
    %v719 = vpow.pop %v718
    %v720 = vsel %vm139, %v719, 0.0
    %721 = vadd.xlane.f32.xlu0 %v720
    %v722 = vpop.xlane.xlu0 %721
    %v723 = vrcp.pop %v722
    %v724 = vmul.f32 %v722, %v723
    %v725 = vsub.f32 2.0, %v724
    %v726 = vmul.f32 %v723, %v725
    %v727 = vmul.f32 %v719, %v726
    %728 = vmatprep.subr.mxu0 0.0
    %729 = vmatpush1.msra.mxu0 %v490
    %730 = vmatprep.subr.mxu0 0.0
    %731 = vmatpush1.msra.mxu0 0.0
    %732 = vmatprep.subr.mxu0 0.0
    %733 = vmatpush1.msra.mxu0 0.0
    %734 = vmatprep.subr.mxu0 0.0
    %735 = vmatpush1.msra.mxu0 0.0
    %736 = vmatprep.subr.mxu0 0.0
    %737 = vmatpush1.msra.mxu0 0.0
    %738 = vmatprep.subr.mxu0 0.0
    %739 = vmatpush1.msra.mxu0 0.0
    %740 = vmatprep.subr.mxu0 0.0
    %741 = vmatpush1.msra.mxu0 0.0
    %742 = vmatprep.subr.mxu0 0.0
    %743 = vmatpush1.msra.mxu0 0.0
    %744 = vmatprep.subr.mxu0 0.0
    %745 = vmatpush1.msra.mxu0 0.0
    %746 = vmatprep.subr.mxu0 0.0
    %747 = vmatpush1.msra.mxu0 0.0
    %748 = vmatprep.subr.mxu0 0.0
    %749 = vmatpush1.msra.mxu0 0.0
    %750 = vmatprep.subr.mxu0 0.0
    %751 = vmatpush1.msra.mxu0 0.0
    %752 = vmatprep.subr.mxu0 0.0
    %753 = vmatpush1.msra.mxu0 0.0
    %754 = vmatprep.subr.mxu0 0.0
    %755 = vmatpush1.msra.mxu0 0.0
    %756 = vmatprep.subr.mxu0 0.0
    %757 = vmatpush1.msra.mxu0 0.0
    %758 = vmatprep.subr.mxu0 0.0
    %759 = vmatpush1.msra.mxu0 0.0
    %760 = vmatprep.subr.mxu0 0.0
    %761 = vmatpush1.msra.mxu0 0.0
    %762 = vmatprep.subr.mxu0 0.0
    %763 = vmatpush1.msra.mxu0 0.0
    %764 = vmatprep.subr.mxu0 0.0
    %765 = vmatpush1.msra.mxu0 0.0
    %766 = vmatprep.subr.mxu0 0.0
    %767 = vmatpush1.msra.mxu0 0.0
    %768 = vmatprep.subr.mxu0 0.0
    %769 = vmatpush1.msra.mxu0 0.0
    %770 = vmatprep.subr.mxu0 0.0
    %771 = vmatpush1.msra.mxu0 0.0
    %772 = vmatprep.subr.mxu0 0.0
    %773 = vmatpush1.msra.mxu0 0.0
    %774 = vmatprep.subr.mxu0 0.0
    %775 = vmatpush1.msra.mxu0 0.0
    %776 = vmatprep.subr.mxu0 0.0
    %777 = vmatpush1.msra.mxu0 0.0
    %778 = vmatprep.subr.mxu0 0.0
    %779 = vmatpush1.msra.mxu0 0.0
    %780 = vmatprep.subr.mxu0 0.0
    %781 = vmatpush1.msra.mxu0 0.0
    %782 = vmatprep.subr.mxu0 0.0
    %783 = vmatpush1.msra.mxu0 0.0
    %784 = vmatprep.subr.mxu0 0.0
    %785 = vmatpush1.msra.mxu0 0.0
    %786 = vmatprep.subr.mxu0 0.0
    %787 = vmatpush1.msra.mxu0 0.0
    %788 = vmatprep.subr.mxu0 0.0
    %789 = vmatpush1.msra.mxu0 0.0
    %790 = vmatprep.subr.mxu0 0.0
    %791 = vmatpush1.msra.mxu0 0.0
    %792 = vmatprep.mubr.f32.mxu0 0.0
    %793 = vmatmul.mubr.f32.gmra.mrb[0].mxu0 %v301
    %v794 = vpop.f32.mrb[0].mxu0
    %v795 = vadd.f32 0.0, %v794
    %v796 = vpop.f32.mrb[0].mxu0
    %797 = vdwg.mxu0
    %v799 = vsel %vm63, %v795, 0
    %801 = vmatprep.subr.mxu0 0.0
    %802 = vmatpush1.msra.mxu0 %v46
    %803 = vmatprep.subr.mxu0 0.0
    %804 = vmatpush1.msra.mxu0 %v47
    %805 = vmatprep.subr.mxu0 0.0
    %806 = vmatpush1.msra.mxu0 0.0
    %807 = vmatprep.subr.mxu0 0.0
    %808 = vmatpush1.msra.mxu0 0.0
    %809 = vmatprep.subr.mxu0 0.0
    %810 = vmatpush1.msra.mxu0 0.0
    %811 = vmatprep.subr.mxu0 0.0
    %812 = vmatpush1.msra.mxu0 0.0
    %813 = vmatprep.subr.mxu0 0.0
    %814 = vmatpush1.msra.mxu0 0.0
    %815 = vmatprep.subr.mxu0 0.0
    %816 = vmatpush1.msra.mxu0 0.0
    %817 = vmatprep.subr.mxu0 0.0
    %818 = vmatpush1.msra.mxu0 0.0
    %819 = vmatprep.subr.mxu0 0.0
    %820 = vmatpush1.msra.mxu0 0.0
    %821 = vmatprep.subr.mxu0 0.0
    %822 = vmatpush1.msra.mxu0 0.0
    %823 = vmatprep.subr.mxu0 0.0
    %824 = vmatpush1.msra.mxu0 0.0
    %825 = vmatprep.subr.mxu0 0.0
    %826 = vmatpush1.msra.mxu0 0.0
    %827 = vmatprep.subr.mxu0 0.0
    %828 = vmatpush1.msra.mxu0 0.0
    %829 = vmatprep.subr.mxu0 0.0
    %830 = vmatpush1.msra.mxu0 0.0
    %831 = vmatprep.subr.mxu0 0.0
    %832 = vmatpush1.msra.mxu0 0.0
    %833 = vmatprep.subr.mxu0 0.0
    %834 = vmatpush1.msra.mxu0 0.0
    %835 = vmatprep.subr.mxu0 0.0
    %836 = vmatpush1.msra.mxu0 0.0
    %837 = vmatprep.subr.mxu0 0.0
    %838 = vmatpush1.msra.mxu0 0.0
    %839 = vmatprep.subr.mxu0 0.0
    %840 = vmatpush1.msra.mxu0 0.0
    %841 = vmatprep.subr.mxu0 0.0
    %842 = vmatpush1.msra.mxu0 0.0
    %843 = vmatprep.subr.mxu0 0.0
    %844 = vmatpush1.msra.mxu0 0.0
    %845 = vmatprep.subr.mxu0 0.0
    %846 = vmatpush1.msra.mxu0 0.0
    %847 = vmatprep.subr.mxu0 0.0
    %848 = vmatpush1.msra.mxu0 0.0
    %849 = vmatprep.subr.mxu0 0.0
    %850 = vmatpush1.msra.mxu0 0.0
    %851 = vmatprep.subr.mxu0 0.0
    %852 = vmatpush1.msra.mxu0 0.0
    %853 = vmatprep.subr.mxu0 0.0
    %854 = vmatpush1.msra.mxu0 0.0
    %855 = vmatprep.subr.mxu0 0.0
    %856 = vmatpush1.msra.mxu0 0.0
    %857 = vmatprep.subr.mxu0 0.0
    %858 = vmatpush1.msra.mxu0 0.0
    %859 = vmatprep.subr.mxu0 0.0
    %860 = vmatpush1.msra.mxu0 0.0
    %861 = vmatprep.subr.mxu0 0.0
    %862 = vmatpush1.msra.mxu0 0.0
    %863 = vmatprep.subr.mxu0 0.0
    %864 = vmatpush1.msra.mxu0 0.0
    %865 = vmatprep.mubr.f32.mxu0 0.0
    %866 = vmatmul.mubr.f32.gmra.mrb[0].mxu0 %v799
    %v867 = vpop.f32.mrb[0].mxu0
    %v868 = vadd.f32 %v49, %v867
    %v869 = vpop.f32.mrb[0].mxu0
    %870 = vdwg.mxu0
    %v871 = vsel %vm139, %v868, -inf
    %872 = vmax.xlane.f32.xlu0 %v871
    %v873 = vpop.xlane.xlu0 %872
    %v874 = vsub.f32 %v868, %v873
    %v875 = vmul.f32 %v874, 1.442695
    %v876 = vpow.pop %v875
    %v877 = vsel %vm139, %v876, 0.0
    %878 = vadd.xlane.f32.xlu0 %v877
    %v879 = vpop.xlane.xlu0 %878
    %v880 = vrcp.pop %v879
    %v881 = vmul.f32 %v879, %v880
    %v882 = vsub.f32 2.0, %v881
    %v883 = vmul.f32 %v880, %v882
    %v884 = vmul.f32 %v876, %v883
    %v885 = vlaneseq
    %v886 = vshrl.u32 %v885, 7
    %v887 = vsub.s32 0, %v886
    %v888 = vrot.slane %v495, %v887
    %v889 = vmul.f32 %v727, %v888
    %v890 = vsel %vm139, %v889, 0.0
    %891 = vadd.xlane.f32.xlu0 %v890
    %v892 = vpop.xlane.xlu0 %891
    %v893 = vlaneseq
    %v894 = vshrl.u32 %v893, 7
    %v895 = vsub.s32 1, %v894
    %v896 = vrot.slane %v495, %v895
    %v897 = vmul.f32 %v884, %v896
    %v898 = vsel %vm139, %v897, 0.0
    %899 = vadd.xlane.f32.xlu0 %v898
    %v900 = vpop.xlane.xlu0 %899
    %s901 = scalar_lea.vmem [#allocation2], 8
    %902 = vst.msk [vmem:[%s901] sm:$0xff] %vm139, %v727
    %s903 = scalar_lea.vmem [#allocation4], 8
    %904 = vst.msk [vmem:[%s903] sm:$0xff] %vm139, %v884
    %v905 = vadd.f32 %v892, %v570
    %s906 = scalar_lea.vmem %s10, 8
    %907 = vst.msk [vmem:[%s906] sm:$0xff] %vm479, %v905
    %v908 = vadd.f32 %v900, %v570
    %909 = vst.msk [vmem:[%s906] sm:$0xff] %vm482, %v908
    %911 = vrot.lane.b32.xlu0 %v570, 127
    %v912 = vpop.permute.xlu0 %911
    %s914 = scalar_lea.vmem %s13, 8
    %915 = vst.msk [vmem:[%s914] sm:$0xff] %vm479, %v912
    // Predicated region
    $region42: #{double_dgc_forward.1} parent=1 // pred_check
      _
    $region43: #{double_dgc_forward.1} parent=1 // pred_check_branch
      %917 = sbr.rel (0) target = $region45
    $region44: #{double_dgc_forward.1} parent=1 // pred_region
      _
    $region45: #{double_dgc_forward.1} parent=1 // pred_fallthru
      _
    // Predicated region
    $region46: #{double_dgc_forward.1} parent=1 // pred_check
      _
    $region47: #{double_dgc_forward.1} parent=1 // pred_check_branch
      %919 = sbr.rel (0) target = $region49
    $region48: #{double_dgc_forward.1} parent=1 // pred_region
      %s921 = ssub.s32 256, 256
      %922 = vsyncadd [#allocation3], %s921
      %s923 = sshll.u32 [#allocation2], 4
      %s924 = int_to_ptr.vmem [resolvable:$true] %s923
      %929 = dma.vmem_to_hbm [thread:$0]  %s924, 256, %s11, [#allocation3], 128, 128, 8
    $region49: #{double_dgc_forward.1} parent=1 // pred_fallthru
      _
    // Predicated region
    $region50: #{double_dgc_forward.1} parent=1 // pred_check
      _
    $region51: #{double_dgc_forward.1} parent=1 // pred_check_branch
      %931 = sbr.rel (0) target = $region53
    $region52: #{double_dgc_forward.1} parent=1 // pred_region
      %s933 = ssub.s32 256, 256
      %934 = vsyncadd [#allocation5], %s933
      %s935 = sshll.u32 [#allocation4], 4
      %s936 = int_to_ptr.vmem [resolvable:$true] %s935
      %941 = dma.vmem_to_hbm [thread:$0]  %s936, 256, %s12, [#allocation5], 128, 128, 8
    $region53: #{double_dgc_forward.1} parent=1 // pred_fallthru
      _
    // Predicated region
    $region54: #{double_dgc_forward.1} parent=1 // pred_check
      _
    $region55: #{double_dgc_forward.1} parent=1 // pred_check_branch
      %943 = sbr.rel (0) target = $region57
    $region56: #{double_dgc_forward.1} parent=1 // pred_region
      _
    $region57: #{double_dgc_forward.1} parent=1 // pred_fallthru
      _
    // Predicated region
    $region58: #{double_dgc_forward.1} parent=1 // pred_check
      _
    $region59: #{double_dgc_forward.1} parent=1 // pred_check_branch
      %945 = sbr.rel (0) target = $region61
    $region60: #{double_dgc_forward.1} parent=1 // pred_region
      _
    $region61: #{double_dgc_forward.1} parent=1 // pred_fallthru
      _
    // Predicated region
    $region62: #{double_dgc_forward.1} parent=1 // pred_check
      _
    $region63: #{double_dgc_forward.1} parent=1 // pred_check_branch
      %947 = sbr.rel (0) target = $region65
    $region64: #{double_dgc_forward.1} parent=1 // pred_region
      %948 = dma.done [#allocation3], 256
    $region65: #{double_dgc_forward.1} parent=1 // pred_fallthru
      _
    // Predicated region
    $region66: #{double_dgc_forward.1} parent=1 // pred_check
      _
    $region67: #{double_dgc_forward.1} parent=1 // pred_check_branch
      %950 = sbr.rel (0) target = $region69
    $region68: #{double_dgc_forward.1} parent=1 // pred_region
      %951 = dma.done [#allocation5], 256
    $region69: #{double_dgc_forward.1} parent=1 // pred_fallthru
      _
    // Predicated region
    $region70: #{double_dgc_forward.1} parent=1 // pred_check
      _
    $region71: #{double_dgc_forward.1} parent=1 // pred_check_branch
      %953 = sbr.rel (0) target = $region73
    $region72: #{double_dgc_forward.1} parent=1 // pred_region
      _
    $region73: #{double_dgc_forward.1} parent=1 // pred_fallthru
      _
    %954 = vsyncpa [#allocation3], 1
    %955 = vsyncpa [#allocation5], 1

</llo_original>
